<compile_context>
chip_gen: v5e
topology: v5e:2x2
jax: 0.10.0
libtpu: 0.0.40
codegen_flags: <defaults>
</compile_context>

<pallas_src>
import functools

import numpy as np
import jax
import jax.numpy as jnp
from jax import lax
from jax.experimental import pallas as pl
from jax.experimental.pallas import tpu as pltpu


MASK_FILL = -1000000000.0          # Python float (NOT a jnp array -> no capture)
VMEM_LIMIT = 32 * 1024 * 1024      # conservative; safe on v5e/v6e/v7x


def _pick_tile(dim, preferred, align):
    """Largest tile <= `preferred` that divides `dim` and is a multiple of
    `align`; falls back to the full dimension (always BlockSpec-legal)."""
    if dim <= preferred:
        return dim
    if dim % align != 0:
        # TODO(synk): for very long unaligned sequences, pad in the wrapper
        # instead of a full-dim block (VMEM blow-up risk on v7x's 64 MiB).
        return dim
    t = (preferred // align) * align
    while t >= align:
        if dim % t == 0:
            return t
        t -= align
    return dim


# ----------------------------------------------------------------------------
# Weight-resident linear:  y = x @ w_t + b   (w_t already transposed to (K, N))
# Grid over M only; the full (K, N) weight block stays VMEM-resident.
# ----------------------------------------------------------------------------
def _linear_kernel(x_ref, w_ref, b_ref, o_ref, *, compute_dtype):
    acc = jnp.dot(
        x_ref[...].astype(compute_dtype),
        w_ref[...].astype(compute_dtype),
        preferred_element_type=jnp.float32,
    )
    o_ref[...] = (acc + b_ref[...].astype(jnp.float32)).astype(o_ref.dtype)


def linear(x, w_t, b, *, out_dtype, compute_dtype=jnp.bfloat16, tm=256):
    """x: (M, K); w_t: (K, N); b: (N,). Returns (M, N) in out_dtype."""
    M, K = x.shape
    N = w_t.shape[1]
    tm = _pick_tile(M, tm, 16 if M % 16 == 0 else 8)
    grid = (M // tm,)
    return pl.pallas_call(
        functools.partial(_linear_kernel, compute_dtype=compute_dtype),
        out_shape=jax.ShapeDtypeStruct((M, N), out_dtype),
        grid=grid,
        in_specs=[
            pl.BlockSpec((tm, K), lambda i: (i, 0)),
            pl.BlockSpec((K, N), lambda i: (0, 0)),   # weight: VMEM-resident
            pl.BlockSpec((1, N), lambda i: (0, 0)),
        ],
        out_specs=pl.BlockSpec((tm, N), lambda i: (i, 0)),
        compiler_params=pltpu.CompilerParams(
            dimension_semantics=("parallel",),
            vmem_limit_bytes=VMEM_LIMIT,
        ),
    )(x, w_t, b.reshape(1, N))


# ----------------------------------------------------------------------------
# Flash-style multi-head attention (all heads per grid step, online softmax)
# Scale is already folded into Q; mask becomes an additive bias per block.
# ----------------------------------------------------------------------------
def _attention_kernel(q_ref, k_ref, v_ref, *rest, num_heads, compute_dtype,
                      has_mask):
    if has_mask:
        mask_ref, o_ref, stats_sc, acc_sc = rest
    else:
        o_ref, stats_sc, acc_sc = rest

    kv = pl.program_id(2)
    tq = stats_sc.shape[0]

    @pl.when(kv == 0)
    def _init():
        stats_sc[:, :num_heads] = jnp.full((tq, num_heads), -jnp.inf, stats_sc.dtype)
        stats_sc[:, num_heads:] = jnp.zeros((tq, num_heads), stats_sc.dtype)
        acc_sc[...] = jnp.zeros(acc_sc.shape, acc_sc.dtype)

    q = q_ref[0]                       # (tq, E) compute_dtype (pre-scaled)
    k = k_ref[0]                       # (tk, E)
    v = v_ref[0]                       # (tk, E)

    if has_mask:
        # One int32 compare + select per block, shared by all heads.
        bias = jnp.where(mask_ref[0] == 0, MASK_FILL, 0.0)   # (tq, tk) f32

    head_dim = q.shape[-1] // num_heads
    # Static Python loop is fine for small H; switch to lax.fori_loop with
    # pl.ds head slices if num_heads >= ~16 (vreg live-range pressure).
    for h in range(num_heads):
        lo, hi = h * head_dim, (h + 1) * head_dim
        qh = q[:, lo:hi]               # (tq, D)
        kh = k[:, lo:hi]               # (tk, D)
        vh = v[:, lo:hi]               # (tk, D)

        # scores = q_scaled @ k^T ; contraction over D, no materialized .T
        s = lax.dot_general(
            qh, kh, (((1,), (1,)), ((), ())),
            preferred_element_type=jnp.float32,
        )
        if has_mask:
            s = s + bias

        m_prev = stats_sc[:, h:h + 1]                          # (tq, 1)
        l_prev = stats_sc[:, num_heads + h:num_heads + h + 1]  # (tq, 1)
        m_new = jnp.maximum(m_prev, jnp.max(s, axis=-1, keepdims=True))
        alpha = jnp.exp(m_prev - m_new)
        p = jnp.exp(s - m_new)                                 # (tq, tk) f32
        stats_sc[:, num_heads + h:num_heads + h + 1] = (
            alpha * l_prev + jnp.sum(p, axis=-1, keepdims=True))
        acc_sc[:, lo:hi] = alpha * acc_sc[:, lo:hi] + jnp.dot(
            p.astype(compute_dtype), vh, preferred_element_type=jnp.float32)
        stats_sc[:, h:h + 1] = m_new

    @pl.when(kv == pl.num_programs(2) - 1)
    def _finalize():
        # TODO(synk): dropout on attention probabilities omitted (eval mode).
        for h in range(num_heads):
            lo, hi = h * head_dim, (h + 1) * head_dim
            l_h = stats_sc[:, num_heads + h:num_heads + h + 1]
            acc_sc[:, lo:hi] = acc_sc[:, lo:hi] / l_h
        # Single lane-dense (tq, E) store.
        o_ref[0] = acc_sc[...].astype(o_ref.dtype)


def attention(q, k, v, mask, *, num_heads, compute_dtype=jnp.bfloat16,
              tq=512, tk=512):
    """q: (B, Sq, E); k/v: (B, Sk, E); mask: (B, Sq, Sk) int or None."""
    B, Sq, E = q.shape
    Sk = k.shape[1]
    tq = _pick_tile(Sq, tq, 16 if Sq % 16 == 0 else 8)
    tk = _pick_tile(Sk, tk, 128)
    grid = (B, Sq // tq, Sk // tk)

    in_specs = [
        pl.BlockSpec((1, tq, E), lambda b, qi, ki: (b, qi, 0)),
        pl.BlockSpec((1, tk, E), lambda b, qi, ki: (b, ki, 0)),
        pl.BlockSpec((1, tk, E), lambda b, qi, ki: (b, ki, 0)),
    ]
    operands = [q, k, v]
    if mask is not None:
        # Pass the caller's mask directly: each block is visited once, so a
        # wrapper-side dtype conversion would only add HBM traffic.
        in_specs.append(pl.BlockSpec((1, tq, tk), lambda b, qi, ki: (b, qi, ki)))
        operands.append(mask)

    return pl.pallas_call(
        functools.partial(_attention_kernel, num_heads=num_heads,
                          compute_dtype=compute_dtype, has_mask=mask is not None),
        out_shape=jax.ShapeDtypeStruct((B, Sq, E), compute_dtype),
        grid=grid,
        in_specs=in_specs,
        out_specs=pl.BlockSpec((1, tq, E), lambda b, qi, ki: (b, qi, 0)),
        scratch_shapes=[
            # Packed online-softmax stats: columns [0,H) = running max,
            # columns [H,2H) = running sum (one lane-padded slab, not two).
            pltpu.VMEM((tq, 2 * num_heads), jnp.float32),
            # Single lane-dense accumulator slab for all heads.
            pltpu.VMEM((tq, E), jnp.float32),
        ],
        compiler_params=pltpu.CompilerParams(
            dimension_semantics=("parallel", "parallel", "arbitrary"),
            vmem_limit_bytes=VMEM_LIMIT,
        ),
    )(*operands)


# ----------------------------------------------------------------------------
# Full module forward
# ----------------------------------------------------------------------------
def multi_head_attention(params, query, key, value, mask=None, *,
                         num_heads, compute_dtype=jnp.bfloat16):
    B, Sq, E = query.shape
    Sk = key.shape[1]
    head_dim = E // num_heads
    scale = 1.0 / float(np.sqrt(head_dim))

    # Fold the 1/sqrt(D) attention scale into the Q projection (weight-side),
    # pre-transpose weights to (K, N), cast MXU operands to bf16 once.
    wq_t = (params["wq"].T * scale).astype(compute_dtype)
    bq = params["bq"] * scale
    wk_t = params["wk"].T.astype(compute_dtype)
    wv_t = params["wv"].T.astype(compute_dtype)
    wo_t = params["wo"].T.astype(compute_dtype)

    # Q/K/V projections (distinct input tensors -> three weight-resident calls).
    q = linear(query.reshape(B * Sq, E), wq_t, bq,
               out_dtype=compute_dtype, compute_dtype=compute_dtype)
    k = linear(key.reshape(B * Sk, E), wk_t, params["bk"],
               out_dtype=compute_dtype, compute_dtype=compute_dtype)
    v = linear(value.reshape(B * Sk, E), wv_t, params["bv"],
               out_dtype=compute_dtype, compute_dtype=compute_dtype)

    # Flash attention over all heads; head split/merge happens inside the
    # kernel via column slices of E (no transposes between pallas_calls).
    attn = attention(q.reshape(B, Sq, E), k.reshape(B, Sk, E),
                     v.reshape(B, Sk, E), mask,
                     num_heads=num_heads, compute_dtype=compute_dtype)

    # Output projection back to f32 (module output dtype).
    out = linear(attn.reshape(B * Sq, E), wo_t, params["bo"],
                 out_dtype=jnp.float32, compute_dtype=compute_dtype)
    return out.reshape(B, Sq, E)


# ----------------------------------------------------------------------------
# Deterministic parameter init (PyTorch nn.Linear-style uniform bounds).
# ----------------------------------------------------------------------------
def init_params(key, embedding_dim):
    bound = 1.0 / np.sqrt(embedding_dim)
    names = ["wq", "bq", "wk", "bk", "wv", "bv", "wo", "bo"]
    keys = jax.random.split(key, len(names))
    params = {}
    for i, name in enumerate(names):
        shape = ((embedding_dim, embedding_dim) if name.startswith("w")
                 else (embedding_dim,))
        params[name] = jax.random.uniform(keys[i], shape, jnp.float32,
                                          minval=-bound, maxval=bound)
    return params


# Pure-JAX f32 reference (mirrors the PyTorch forward, eval mode).
def reference(params, query, key, value, mask, num_heads):
    B, Sq, E = query.shape
    D = E // num_heads
    q = query @ params["wq"].T + params["bq"]
    k = key @ params["wk"].T + params["bk"]
    v = value @ params["wv"].T + params["bv"]
    q = q.reshape(B, Sq, num_heads, D).transpose(0, 2, 1, 3)
    k = k.reshape(B, -1, num_heads, D).transpose(0, 2, 1, 3)
    v = v.reshape(B, -1, num_heads, D).transpose(0, 2, 1, 3)
    scores = jnp.einsum("bhqd,bhkd->bhqk", q / np.sqrt(D), k)
    if mask is not None:
        scores = jnp.where(mask[:, None] == 0, -1000000000.0, scores)
    p = jax.nn.softmax(scores, axis=-1)
    out = jnp.einsum("bhqk,bhkd->bhqd", p, v)
    out = out.transpose(0, 2, 1, 3).reshape(B, Sq, E)
    return out @ params["wo"].T + params["bo"]


if __name__ == "__main__":
    B, S, E, H = 2, 8, 32, 4

    root = jax.random.PRNGKey(0)
    kp, kq, kk, kv = jax.random.split(root, 4)
    params = init_params(kp, E)

    query = jax.random.normal(kq, (B, S, E), jnp.float32)
    key = jax.random.normal(kk, (B, S, E), jnp.float32)
    value = jax.random.normal(kv, (B, S, E), jnp.float32)
    # Causal mask (B, S, S): mask == 0 positions are filled with -1e9.
    mask = jnp.broadcast_to(jnp.tril(jnp.ones((S, S), jnp.int32)), (B, S, S))

    fwd = jax.jit(multi_head_attention, static_argnames=("num_heads",))

    # Masked path (bf16 MXU operands -> relaxed tolerance vs f32 reference).
    out = jax.block_until_ready(fwd(params, query, key, value, mask, num_heads=H))
    ref = reference(params, query, key, value, mask, H)
    np.testing.assert_allclose(np.asarray(out), np.asarray(ref),
                               rtol=2e-2, atol=3e-2)

    # mask=None path (attention kernel compiled without the mask DMA).
    out_nm = jax.block_until_ready(fwd(params, query, key, value, None, num_heads=H))
    ref_nm = reference(params, query, key, value, None, H)
    np.testing.assert_allclose(np.asarray(out_nm), np.asarray(ref_nm),
                               rtol=2e-2, atol=3e-2)

    print("KERNEL_OK")
</pallas_src>

<mosaic_0001>
module attributes {stable_mosaic.version = 11 : i64} {
  func.func @_linear_kernel(%arg0: i32, %arg1: memref<16x32xf32, #tpu.memory_space<vmem>>, %arg2: memref<32x32xbf16, #tpu.memory_space<vmem>>, %arg3: memref<1x32xf32, #tpu.memory_space<vmem>>, %arg4: memref<16x32xbf16, #tpu.memory_space<vmem>>) attributes {dimension_semantics = [#tpu.dimension_semantics<parallel>], iteration_bounds = array<i64: 1>, scalar_prefetch = 0 : i64, scratch_operands = 0 : i64, tpu.core_type = #tpu.core_type<tc>, window_params = [{transform_indices = @transform_0, window_bounds = array<i64: 16, 32>}, {pipeline_mode = #tpu.pipeline_mode<synchronous>, transform_indices = @transform_1, window_bounds = array<i64: 32, 32>}, {pipeline_mode = #tpu.pipeline_mode<synchronous>, transform_indices = @transform_2, window_bounds = array<i64: 1, 32>}, {transform_indices = @transform_3, window_bounds = array<i64: 16, 32>}]} {
    %c0 = arith.constant 0 : index
    %c0_0 = arith.constant 0 : index
    %0 = vector.load %arg1[%c0, %c0_0] : memref<16x32xf32, #tpu.memory_space<vmem>>, vector<16x32xf32>
    %1 = arith.truncf %0 : vector<16x32xf32> to vector<16x32xbf16>
    %c0_1 = arith.constant 0 : index
    %c0_2 = arith.constant 0 : index
    %2 = vector.load %arg2[%c0_1, %c0_2] : memref<32x32xbf16, #tpu.memory_space<vmem>>, vector<32x32xbf16>
    %cst = arith.constant dense<0.000000e+00> : vector<16x32xf32>
    %3 = tpu.matmul %1, %2, %cst {dimension_numbers = #tpu.dot_dimension_numbers<[1], [0], [0], [1], [0, 0, 1, 1], [], []>} : vector<16x32xbf16>, vector<32x32xbf16>, vector<16x32xf32> -> vector<16x32xf32>
    %c0_3 = arith.constant 0 : index
    %c0_4 = arith.constant 0 : index
    %4 = vector.load %arg3[%c0_3, %c0_4] : memref<1x32xf32, #tpu.memory_space<vmem>>, vector<1x32xf32>
    %5 = vector.broadcast %4 : vector<1x32xf32> to vector<16x32xf32>
    %6 = arith.addf %3, %5 : vector<16x32xf32>
    %7 = arith.truncf %6 : vector<16x32xf32> to vector<16x32xbf16>
    %c0_5 = arith.constant 0 : index
    %c0_6 = arith.constant 0 : index
    %8 = vector.load %arg4[%c0_5, %c0_6] : memref<16x32xbf16, #tpu.memory_space<vmem>>, vector<16x32xbf16>
    tpu.vector_store %arg4[%c0_5, %c0_6], %7 {strides = array<i32>} : memref<16x32xbf16, #tpu.memory_space<vmem>>, vector<16x32xbf16>,
    return
  }
  func.func @transform_0(%arg0: i32) -> (i32, i32) {
    %c0_i32 = arith.constant 0 : i32
    %c0_i32_0 = arith.constant 0 : i32
    return %arg0, %c0_i32 : i32, i32
  }
  func.func @transform_1(%arg0: i32) -> (i32, i32) {
    %c0_i32 = arith.constant 0 : i32
    %c0_i32_0 = arith.constant 0 : i32
    %c0_i32_1 = arith.constant 0 : i32
    return %c0_i32, %c0_i32_0 : i32, i32
  }
  func.func @transform_2(%arg0: i32) -> (i32, i32) {
    %c0_i32 = arith.constant 0 : i32
    %c0_i32_0 = arith.constant 0 : i32
    %c0_i32_1 = arith.constant 0 : i32
    return %c0_i32, %c0_i32_0 : i32, i32
  }
  func.func @transform_3(%arg0: i32) -> (i32, i32) {
    %c0_i32 = arith.constant 0 : i32
    %c0_i32_0 = arith.constant 0 : i32
    return %arg0, %c0_i32 : i32, i32
  }
}

module attributes {stable_mosaic.version = 11 : i64} {
  func.func @_linear_kernel(%arg0: i32, %arg1: memref<16x32xbf16, #tpu.memory_space<vmem>>, %arg2: memref<32x32xbf16, #tpu.memory_space<vmem>>, %arg3: memref<1x32xf32, #tpu.memory_space<vmem>>, %arg4: memref<16x32xf32, #tpu.memory_space<vmem>>) attributes {dimension_semantics = [#tpu.dimension_semantics<parallel>], iteration_bounds = array<i64: 1>, scalar_prefetch = 0 : i64, scratch_operands = 0 : i64, tpu.core_type = #tpu.core_type<tc>, window_params = [{transform_indices = @transform_0, window_bounds = array<i64: 16, 32>}, {pipeline_mode = #tpu.pipeline_mode<synchronous>, transform_indices = @transform_1, window_bounds = array<i64: 32, 32>}, {pipeline_mode = #tpu.pipeline_mode<synchronous>, transform_indices = @transform_2, window_bounds = array<i64: 1, 32>}, {transform_indices = @transform_3, window_bounds = array<i64: 16, 32>}]} {
    %c0 = arith.constant 0 : index
    %c0_0 = arith.constant 0 : index
    %0 = vector.load %arg1[%c0, %c0_0] : memref<16x32xbf16, #tpu.memory_space<vmem>>, vector<16x32xbf16>
    %c0_1 = arith.constant 0 : index
    %c0_2 = arith.constant 0 : index
    %1 = vector.load %arg2[%c0_1, %c0_2] : memref<32x32xbf16, #tpu.memory_space<vmem>>, vector<32x32xbf16>
    %cst = arith.constant dense<0.000000e+00> : vector<16x32xf32>
    %2 = tpu.matmul %0, %1, %cst {dimension_numbers = #tpu.dot_dimension_numbers<[1], [0], [0], [1], [0, 0, 1, 1], [], []>} : vector<16x32xbf16>, vector<32x32xbf16>, vector<16x32xf32> -> vector<16x32xf32>
    %c0_3 = arith.constant 0 : index
    %c0_4 = arith.constant 0 : index
    %3 = vector.load %arg3[%c0_3, %c0_4] : memref<1x32xf32, #tpu.memory_space<vmem>>, vector<1x32xf32>
    %4 = vector.broadcast %3 : vector<1x32xf32> to vector<16x32xf32>
    %5 = arith.addf %2, %4 : vector<16x32xf32>
    %c0_5 = arith.constant 0 : index
    %c0_6 = arith.constant 0 : index
    %6 = vector.load %arg4[%c0_5, %c0_6] : memref<16x32xf32, #tpu.memory_space<vmem>>, vector<16x32xf32>
    tpu.vector_store %arg4[%c0_5, %c0_6], %5 {strides = array<i32>} : memref<16x32xf32, #tpu.memory_space<vmem>>, vector<16x32xf32>,
    return
  }
  func.func @transform_0(%arg0: i32) -> (i32, i32) {
    %c0_i32 = arith.constant 0 : i32
    %c0_i32_0 = arith.constant 0 : i32
    return %arg0, %c0_i32 : i32, i32
  }
  func.func @transform_1(%arg0: i32) -> (i32, i32) {
    %c0_i32 = arith.constant 0 : i32
    %c0_i32_0 = arith.constant 0 : i32
    %c0_i32_1 = arith.constant 0 : i32
    return %c0_i32, %c0_i32_0 : i32, i32
  }
  func.func @transform_2(%arg0: i32) -> (i32, i32) {
    %c0_i32 = arith.constant 0 : i32
    %c0_i32_0 = arith.constant 0 : i32
    %c0_i32_1 = arith.constant 0 : i32
    return %c0_i32, %c0_i32_0 : i32, i32
  }
  func.func @transform_3(%arg0: i32) -> (i32, i32) {
    %c0_i32 = arith.constant 0 : i32
    %c0_i32_0 = arith.constant 0 : i32
    return %arg0, %c0_i32 : i32, i32
  }
}

module attributes {stable_mosaic.version = 11 : i64} {
  func.func @_attention_kernel(%arg0: i32, %arg1: i32, %arg2: i32, %arg3: memref<1x8x32xbf16, #tpu.memory_space<vmem>>, %arg4: memref<1x8x32xbf16, #tpu.memory_space<vmem>>, %arg5: memref<1x8x32xbf16, #tpu.memory_space<vmem>>, %arg6: memref<1x8x8xi32, #tpu.memory_space<vmem>>, %arg7: memref<1x8x32xbf16, #tpu.memory_space<vmem>>, %arg8: memref<8x8xf32, #tpu.memory_space<vmem>>, %arg9: memref<8x32xf32, #tpu.memory_space<vmem>>) attributes {dimension_semantics = [#tpu.dimension_semantics<parallel>, #tpu.dimension_semantics<parallel>, #tpu.dimension_semantics<arbitrary>], iteration_bounds = array<i64: 2, 1, 1>, scalar_prefetch = 0 : i64, scratch_operands = 2 : i64, tpu.core_type = #tpu.core_type<tc>, window_params = [{transform_indices = @transform_0, window_bounds = array<i64: 1, 8, 32>}, {transform_indices = @transform_1, window_bounds = array<i64: 1, 8, 32>}, {transform_indices = @transform_2, window_bounds = array<i64: 1, 8, 32>}, {transform_indices = @transform_3, window_bounds = array<i64: 1, 8, 8>}, {transform_indices = @transform_4, window_bounds = array<i64: 1, 8, 32>}]} {
    %c0_i32 = arith.constant 0 : i32
    %0 = arith.cmpi eq, %arg2, %c0_i32 : i32
    %1 = arith.extui %0 : i1 to i32
    %c0_i32_0 = arith.constant 0 : i32
    %2 = arith.cmpi ne, %1, %c0_i32_0 : i32
    scf.if %2 {
      %cst_70 = arith.constant 0xFF800000 : f32
      %131 = vector.broadcast %cst_70 : f32 to vector<8x4xf32>
      %c0_71 = arith.constant 0 : index
      %c0_72 = arith.constant 0 : index
      %132 = vector.load %arg8[%c0_71, %c0_72] : memref<8x8xf32, #tpu.memory_space<vmem>>, vector<8x4xf32>
      tpu.vector_store %arg8[%c0_71, %c0_72], %131 {strides = array<i32>} : memref<8x8xf32, #tpu.memory_space<vmem>>, vector<8x4xf32>,
      %cst_73 = arith.constant 0.000000e+00 : f32
      %133 = vector.broadcast %cst_73 : f32 to vector<8x4xf32>
      %c0_74 = arith.constant 0 : index
      %c4_75 = arith.constant 4 : index
      %134 = vector.load %arg8[%c0_74, %c4_75] : memref<8x8xf32, #tpu.memory_space<vmem>>, vector<8x4xf32>
      tpu.vector_store %arg8[%c0_74, %c4_75], %133 {strides = array<i32>} : memref<8x8xf32, #tpu.memory_space<vmem>>, vector<8x4xf32>,
      %cst_76 = arith.constant 0.000000e+00 : f32
      %135 = vector.broadcast %cst_76 : f32 to vector<8x32xf32>
      %c0_77 = arith.constant 0 : index
      %c0_78 = arith.constant 0 : index
      %136 = vector.load %arg9[%c0_77, %c0_78] : memref<8x32xf32, #tpu.memory_space<vmem>>, vector<8x32xf32>
      tpu.vector_store %arg9[%c0_77, %c0_78], %135 {strides = array<i32>} : memref<8x32xf32, #tpu.memory_space<vmem>>, vector<8x32xf32>,
    } else {
    }
    %c0 = arith.constant 0 : index
    %c0_1 = arith.constant 0 : index
    %c0_2 = arith.constant 0 : index
    %3 = vector.load %arg3[%c0, %c0_1, %c0_2] : memref<1x8x32xbf16, #tpu.memory_space<vmem>>, vector<1x8x32xbf16>
    %4 = vector.shape_cast %3 : vector<1x8x32xbf16> to vector<8x32xbf16>
    %c0_3 = arith.constant 0 : index
    %c0_4 = arith.constant 0 : index
    %c0_5 = arith.constant 0 : index
    %5 = vector.load %arg4[%c0_3, %c0_4, %c0_5] : memref<1x8x32xbf16, #tpu.memory_space<vmem>>, vector<1x8x32xbf16>
    %6 = vector.shape_cast %5 : vector<1x8x32xbf16> to vector<8x32xbf16>
    %c0_6 = arith.constant 0 : index
    %c0_7 = arith.constant 0 : index
    %c0_8 = arith.constant 0 : index
    %7 = vector.load %arg5[%c0_6, %c0_7, %c0_8] : memref<1x8x32xbf16, #tpu.memory_space<vmem>>, vector<1x8x32xbf16>
    %8 = vector.shape_cast %7 : vector<1x8x32xbf16> to vector<8x32xbf16>
    %c0_9 = arith.constant 0 : index
    %c0_10 = arith.constant 0 : index
    %c0_11 = arith.constant 0 : index
    %9 = vector.load %arg6[%c0_9, %c0_10, %c0_11] : memref<1x8x8xi32, #tpu.memory_space<vmem>>, vector<1x8x8xi32>
    %10 = vector.shape_cast %9 : vector<1x8x8xi32> to vector<8x8xi32>
    %c0_i32_12 = arith.constant 0 : i32
    %11 = vector.broadcast %c0_i32_12 : i32 to vector<8x8xi32>
    %12 = arith.cmpi eq, %10, %11 : vector<8x8xi32>
    %cst = arith.constant -1.000000e+09 : f32
    %cst_13 = arith.constant 0.000000e+00 : f32
    %13 = vector.broadcast %cst : f32 to vector<8x8xf32>
    %14 = vector.broadcast %cst_13 : f32 to vector<8x8xf32>
    %15 = arith.select %12, %13, %14 : vector<8x8xi1>, vector<8x8xf32>
    %16 = vector.extract_strided_slice %4 {offsets = [0, 0], sizes = [8, 8], strides = [1, 1]} : vector<8x32xbf16> to vector<8x8xbf16>
    %17 = vector.extract_strided_slice %6 {offsets = [0, 0], sizes = [8, 8], strides = [1, 1]} : vector<8x32xbf16> to vector<8x8xbf16>
    %18 = vector.extract_strided_slice %8 {offsets = [0, 0], sizes = [8, 8], strides = [1, 1]} : vector<8x32xbf16> to vector<8x8xbf16>
    %cst_14 = arith.constant dense<0.000000e+00> : vector<8x8xf32>
    %19 = tpu.matmul %16, %17, %cst_14 {dimension_numbers = #tpu.dot_dimension_numbers<[1], [1], [0], [0], [0, 0, 1, 0], [], []>} : vector<8x8xbf16>, vector<8x8xbf16>, vector<8x8xf32> -> vector<8x8xf32>
    %20 = arith.addf %19, %15 : vector<8x8xf32>
    %c0_15 = arith.constant 0 : index
    %c0_16 = arith.constant 0 : index
    %21 = vector.load %arg8[%c0_15, %c0_16] : memref<8x8xf32, #tpu.memory_space<vmem>>, vector<8x1xf32>
    %c0_17 = arith.constant 0 : index
    %c4 = arith.constant 4 : index
    %22 = vector.load %arg8[%c0_17, %c4] : memref<8x8xf32, #tpu.memory_space<vmem>>, vector<8x1xf32>
    %cst_18 = arith.constant dense<0xFF800000> : vector<8xf32>
    %23 = vector.multi_reduction <maximumf>, %20, %cst_18 [1] : vector<8x8xf32> to vector<8xf32>
    %24 = vector.shape_cast %23 : vector<8xf32> to vector<8x1xf32>
    %25 = arith.maximumf %21, %24 : vector<8x1xf32>
    %26 = arith.subf %21, %25 : vector<8x1xf32>
    %27 = math.exp %26 : vector<8x1xf32>
    %28 = vector.broadcast %25 : vector<8x1xf32> to vector<8x8xf32>
    %29 = arith.subf %20, %28 : vector<8x8xf32>
    %30 = math.exp %29 : vector<8x8xf32>
    %31 = arith.mulf %27, %22 : vector<8x1xf32>
    %cst_19 = arith.constant dense<0.000000e+00> : vector<8xf32>
    %32 = vector.multi_reduction <add>, %30, %cst_19 [1] : vector<8x8xf32> to vector<8xf32>
    %33 = vector.shape_cast %32 : vector<8xf32> to vector<8x1xf32>
    %34 = arith.addf %31, %33 : vector<8x1xf32>
    %c0_20 = arith.constant 0 : index
    %c4_21 = arith.constant 4 : index
    %35 = vector.load %arg8[%c0_20, %c4_21] : memref<8x8xf32, #tpu.memory_space<vmem>>, vector<8x1xf32>
    tpu.vector_store %arg8[%c0_20, %c4_21], %34 {strides = array<i32>} : memref<8x8xf32, #tpu.memory_space<vmem>>, vector<8x1xf32>,
    %c0_22 = arith.constant 0 : index
    %c0_23 = arith.constant 0 : index
    %36 = vector.load %arg9[%c0_22, %c0_23] : memref<8x32xf32, #tpu.memory_space<vmem>>, vector<8x8xf32>
    %37 = vector.broadcast %27 : vector<8x1xf32> to vector<8x8xf32>
    %38 = arith.mulf %37, %36 : vector<8x8xf32>
    %39 = arith.truncf %30 : vector<8x8xf32> to vector<8x8xbf16>
    %cst_24 = arith.constant dense<0.000000e+00> : vector<8x8xf32>
    %40 = tpu.matmul %39, %18, %cst_24 {dimension_numbers = #tpu.dot_dimension_numbers<[1], [0], [0], [1], [0, 0, 1, 1], [], []>} : vector<8x8xbf16>, vector<8x8xbf16>, vector<8x8xf32> -> vector<8x8xf32>
    %41 = arith.addf %38, %40 : vector<8x8xf32>
    %c0_25 = arith.constant 0 : index
    %c0_26 = arith.constant 0 : index
    %42 = vector.load %arg9[%c0_25, %c0_26] : memref<8x32xf32, #tpu.memory_space<vmem>>, vector<8x8xf32>
    tpu.vector_store %arg9[%c0_25, %c0_26], %41 {strides = array<i32>} : memref<8x32xf32, #tpu.memory_space<vmem>>, vector<8x8xf32>,
    %c0_27 = arith.constant 0 : index
    %c0_28 = arith.constant 0 : index
    %43 = vector.load %arg8[%c0_27, %c0_28] : memref<8x8xf32, #tpu.memory_space<vmem>>, vector<8x1xf32>
    tpu.vector_store %arg8[%c0_27, %c0_28], %25 {strides = array<i32>} : memref<8x8xf32, #tpu.memory_space<vmem>>, vector<8x1xf32>,
    %44 = vector.extract_strided_slice %4 {offsets = [0, 8], sizes = [8, 8], strides = [1, 1]} : vector<8x32xbf16> to vector<8x8xbf16>
    %45 = vector.extract_strided_slice %6 {offsets = [0, 8], sizes = [8, 8], strides = [1, 1]} : vector<8x32xbf16> to vector<8x8xbf16>
    %46 = vector.extract_strided_slice %8 {offsets = [0, 8], sizes = [8, 8], strides = [1, 1]} : vector<8x32xbf16> to vector<8x8xbf16>
    %cst_29 = arith.constant dense<0.000000e+00> : vector<8x8xf32>
    %47 = tpu.matmul %44, %45, %cst_29 {dimension_numbers = #tpu.dot_dimension_numbers<[1], [1], [0], [0], [0, 0, 1, 0], [], []>} : vector<8x8xbf16>, vector<8x8xbf16>, vector<8x8xf32> -> vector<8x8xf32>
    %48 = arith.addf %47, %15 : vector<8x8xf32>
    %c0_30 = arith.constant 0 : index
    %c1 = arith.constant 1 : index
    %49 = vector.load %arg8[%c0_30, %c1] : memref<8x8xf32, #tpu.memory_space<vmem>>, vector<8x1xf32>
    %c0_31 = arith.constant 0 : index
    %c5 = arith.constant 5 : index
    %50 = vector.load %arg8[%c0_31, %c5] : memref<8x8xf32, #tpu.memory_space<vmem>>, vector<8x1xf32>
    %cst_32 = arith.constant dense<0xFF800000> : vector<8xf32>
    %51 = vector.multi_reduction <maximumf>, %48, %cst_32 [1] : vector<8x8xf32> to vector<8xf32>
    %52 = vector.shape_cast %51 : vector<8xf32> to vector<8x1xf32>
    %53 = arith.maximumf %49, %52 : vector<8x1xf32>
    %54 = arith.subf %49, %53 : vector<8x1xf32>
    %55 = math.exp %54 : vector<8x1xf32>
    %56 = vector.broadcast %53 : vector<8x1xf32> to vector<8x8xf32>
    %57 = arith.subf %48, %56 : vector<8x8xf32>
    %58 = math.exp %57 : vector<8x8xf32>
    %59 = arith.mulf %55, %50 : vector<8x1xf32>
    %cst_33 = arith.constant dense<0.000000e+00> : vector<8xf32>
    %60 = vector.multi_reduction <add>, %58, %cst_33 [1] : vector<8x8xf32> to vector<8xf32>
    %61 = vector.shape_cast %60 : vector<8xf32> to vector<8x1xf32>
    %62 = arith.addf %59, %61 : vector<8x1xf32>
    %c0_34 = arith.constant 0 : index
    %c5_35 = arith.constant 5 : index
    %63 = vector.load %arg8[%c0_34, %c5_35] : memref<8x8xf32, #tpu.memory_space<vmem>>, vector<8x1xf32>
    tpu.vector_store %arg8[%c0_34, %c5_35], %62 {strides = array<i32>} : memref<8x8xf32, #tpu.memory_space<vmem>>, vector<8x1xf32>,
    %c0_36 = arith.constant 0 : index
    %c8 = arith.constant 8 : index
    %64 = vector.load %arg9[%c0_36, %c8] : memref<8x32xf32, #tpu.memory_space<vmem>>, vector<8x8xf32>
    %65 = vector.broadcast %55 : vector<8x1xf32> to vector<8x8xf32>
    %66 = arith.mulf %65, %64 : vector<8x8xf32>
    %67 = arith.truncf %58 : vector<8x8xf32> to vector<8x8xbf16>
    %cst_37 = arith.constant dense<0.000000e+00> : vector<8x8xf32>
    %68 = tpu.matmul %67, %46, %cst_37 {dimension_numbers = #tpu.dot_dimension_numbers<[1], [0], [0], [1], [0, 0, 1, 1], [], []>} : vector<8x8xbf16>, vector<8x8xbf16>, vector<8x8xf32> -> vector<8x8xf32>
    %69 = arith.addf %66, %68 : vector<8x8xf32>
    %c0_38 = arith.constant 0 : index
    %c8_39 = arith.constant 8 : index
    %70 = vector.load %arg9[%c0_38, %c8_39] : memref<8x32xf32, #tpu.memory_space<vmem>>, vector<8x8xf32>
    tpu.vector_store %arg9[%c0_38, %c8_39], %69 {strides = array<i32>} : memref<8x32xf32, #tpu.memory_space<vmem>>, vector<8x8xf32>,
    %c0_40 = arith.constant 0 : index
    %c1_41 = arith.constant 1 : index
    %71 = vector.load %arg8[%c0_40, %c1_41] : memref<8x8xf32, #tpu.memory_space<vmem>>, vector<8x1xf32>
    tpu.vector_store %arg8[%c0_40, %c1_41], %53 {strides = array<i32>} : memref<8x8xf32, #tpu.memory_space<vmem>>, vector<8x1xf32>,
    %72 = vector.extract_strided_slice %4 {offsets = [0, 16], sizes = [8, 8], strides = [1, 1]} : vector<8x32xbf16> to vector<8x8xbf16>
    %73 = vector.extract_strided_slice %6 {offsets = [0, 16], sizes = [8, 8], strides = [1, 1]} : vector<8x32xbf16> to vector<8x8xbf16>
    %74 = vector.extract_strided_slice %8 {offsets = [0, 16], sizes = [8, 8], strides = [1, 1]} : vector<8x32xbf16> to vector<8x8xbf16>
    %cst_42 = arith.constant dense<0.000000e+00> : vector<8x8xf32>
    %75 = tpu.matmul %72, %73, %cst_42 {dimension_numbers = #tpu.dot_dimension_numbers<[1], [1], [0], [0], [0, 0, 1, 0], [], []>} : vector<8x8xbf16>, vector<8x8xbf16>, vector<8x8xf32> -> vector<8x8xf32>
    %76 = arith.addf %75, %15 : vector<8x8xf32>
    %c0_43 = arith.constant 0 : index
    %c2 = arith.constant 2 : index
    %77 = vector.load %arg8[%c0_43, %c2] : memref<8x8xf32, #tpu.memory_space<vmem>>, vector<8x1xf32>
    %c0_44 = arith.constant 0 : index
    %c6 = arith.constant 6 : index
    %78 = vector.load %arg8[%c0_44, %c6] : memref<8x8xf32, #tpu.memory_space<vmem>>, vector<8x1xf32>
    %cst_45 = arith.constant dense<0xFF800000> : vector<8xf32>
    %79 = vector.multi_reduction <maximumf>, %76, %cst_45 [1] : vector<8x8xf32> to vector<8xf32>
    %80 = vector.shape_cast %79 : vector<8xf32> to vector<8x1xf32>
    %81 = arith.maximumf %77, %80 : vector<8x1xf32>
    %82 = arith.subf %77, %81 : vector<8x1xf32>
    %83 = math.exp %82 : vector<8x1xf32>
    %84 = vector.broadcast %81 : vector<8x1xf32> to vector<8x8xf32>
    %85 = arith.subf %76, %84 : vector<8x8xf32>
    %86 = math.exp %85 : vector<8x8xf32>
    %87 = arith.mulf %83, %78 : vector<8x1xf32>
    %cst_46 = arith.constant dense<0.000000e+00> : vector<8xf32>
    %88 = vector.multi_reduction <add>, %86, %cst_46 [1] : vector<8x8xf32> to vector<8xf32>
    %89 = vector.shape_cast %88 : vector<8xf32> to vector<8x1xf32>
    %90 = arith.addf %87, %89 : vector<8x1xf32>
    %c0_47 = arith.constant 0 : index
    %c6_48 = arith.constant 6 : index
    %91 = vector.load %arg8[%c0_47, %c6_48] : memref<8x8xf32, #tpu.memory_space<vmem>>, vector<8x1xf32>
    tpu.vector_store %arg8[%c0_47, %c6_48], %90 {strides = array<i32>} : memref<8x8xf32, #tpu.memory_space<vmem>>, vector<8x1xf32>,
    %c0_49 = arith.constant 0 : index
    %c16 = arith.constant 16 : index
    %92 = vector.load %arg9[%c0_49, %c16] : memref<8x32xf32, #tpu.memory_space<vmem>>, vector<8x8xf32>
    %93 = vector.broadcast %83 : vector<8x1xf32> to vector<8x8xf32>
    %94 = arith.mulf %93, %92 : vector<8x8xf32>
    %95 = arith.truncf %86 : vector<8x8xf32> to vector<8x8xbf16>
    %cst_50 = arith.constant dense<0.000000e+00> : vector<8x8xf32>
    %96 = tpu.matmul %95, %74, %cst_50 {dimension_numbers = #tpu.dot_dimension_numbers<[1], [0], [0], [1], [0, 0, 1, 1], [], []>} : vector<8x8xbf16>, vector<8x8xbf16>, vector<8x8xf32> -> vector<8x8xf32>
    %97 = arith.addf %94, %96 : vector<8x8xf32>
    %c0_51 = arith.constant 0 : index
    %c16_52 = arith.constant 16 : index
    %98 = vector.load %arg9[%c0_51, %c16_52] : memref<8x32xf32, #tpu.memory_space<vmem>>, vector<8x8xf32>
    tpu.vector_store %arg9[%c0_51, %c16_52], %97 {strides = array<i32>} : memref<8x32xf32, #tpu.memory_space<vmem>>, vector<8x8xf32>,
    %c0_53 = arith.constant 0 : index
    %c2_54 = arith.constant 2 : index
    %99 = vector.load %arg8[%c0_53, %c2_54] : memref<8x8xf32, #tpu.memory_space<vmem>>, vector<8x1xf32>
    tpu.vector_store %arg8[%c0_53, %c2_54], %81 {strides = array<i32>} : memref<8x8xf32, #tpu.memory_space<vmem>>, vector<8x1xf32>,
    %100 = vector.extract_strided_slice %4 {offsets = [0, 24], sizes = [8, 8], strides = [1, 1]} : vector<8x32xbf16> to vector<8x8xbf16>
    %101 = vector.extract_strided_slice %6 {offsets = [0, 24], sizes = [8, 8], strides = [1, 1]} : vector<8x32xbf16> to vector<8x8xbf16>
    %102 = vector.extract_strided_slice %8 {offsets = [0, 24], sizes = [8, 8], strides = [1, 1]} : vector<8x32xbf16> to vector<8x8xbf16>
    %cst_55 = arith.constant dense<0.000000e+00> : vector<8x8xf32>
    %103 = tpu.matmul %100, %101, %cst_55 {dimension_numbers = #tpu.dot_dimension_numbers<[1], [1], [0], [0], [0, 0, 1, 0], [], []>} : vector<8x8xbf16>, vector<8x8xbf16>, vector<8x8xf32> -> vector<8x8xf32>
    %104 = arith.addf %103, %15 : vector<8x8xf32>
    %c0_56 = arith.constant 0 : index
    %c3 = arith.constant 3 : index
    %105 = vector.load %arg8[%c0_56, %c3] : memref<8x8xf32, #tpu.memory_space<vmem>>, vector<8x1xf32>
    %c0_57 = arith.constant 0 : index
    %c7 = arith.constant 7 : index
    %106 = vector.load %arg8[%c0_57, %c7] : memref<8x8xf32, #tpu.memory_space<vmem>>, vector<8x1xf32>
    %cst_58 = arith.constant dense<0xFF800000> : vector<8xf32>
    %107 = vector.multi_reduction <maximumf>, %104, %cst_58 [1] : vector<8x8xf32> to vector<8xf32>
    %108 = vector.shape_cast %107 : vector<8xf32> to vector<8x1xf32>
    %109 = arith.maximumf %105, %108 : vector<8x1xf32>
    %110 = arith.subf %105, %109 : vector<8x1xf32>
    %111 = math.exp %110 : vector<8x1xf32>
    %112 = vector.broadcast %109 : vector<8x1xf32> to vector<8x8xf32>
    %113 = arith.subf %104, %112 : vector<8x8xf32>
    %114 = math.exp %113 : vector<8x8xf32>
    %115 = arith.mulf %111, %106 : vector<8x1xf32>
    %cst_59 = arith.constant dense<0.000000e+00> : vector<8xf32>
    %116 = vector.multi_reduction <add>, %114, %cst_59 [1] : vector<8x8xf32> to vector<8xf32>
    %117 = vector.shape_cast %116 : vector<8xf32> to vector<8x1xf32>
    %118 = arith.addf %115, %117 : vector<8x1xf32>
    %c0_60 = arith.constant 0 : index
    %c7_61 = arith.constant 7 : index
    %119 = vector.load %arg8[%c0_60, %c7_61] : memref<8x8xf32, #tpu.memory_space<vmem>>, vector<8x1xf32>
    tpu.vector_store %arg8[%c0_60, %c7_61], %118 {strides = array<i32>} : memref<8x8xf32, #tpu.memory_space<vmem>>, vector<8x1xf32>,
    %c0_62 = arith.constant 0 : index
    %c24 = arith.constant 24 : index
    %120 = vector.load %arg9[%c0_62, %c24] : memref<8x32xf32, #tpu.memory_space<vmem>>, vector<8x8xf32>
    %121 = vector.broadcast %111 : vector<8x1xf32> to vector<8x8xf32>
    %122 = arith.mulf %121, %120 : vector<8x8xf32>
    %123 = arith.truncf %114 : vector<8x8xf32> to vector<8x8xbf16>
    %cst_63 = arith.constant dense<0.000000e+00> : vector<8x8xf32>
    %124 = tpu.matmul %123, %102, %cst_63 {dimension_numbers = #tpu.dot_dimension_numbers<[1], [0], [0], [1], [0, 0, 1, 1], [], []>} : vector<8x8xbf16>, vector<8x8xbf16>, vector<8x8xf32> -> vector<8x8xf32>
    %125 = arith.addf %122, %124 : vector<8x8xf32>
    %c0_64 = arith.constant 0 : index
    %c24_65 = arith.constant 24 : index
    %126 = vector.load %arg9[%c0_64, %c24_65] : memref<8x32xf32, #tpu.memory_space<vmem>>, vector<8x8xf32>
    tpu.vector_store %arg9[%c0_64, %c24_65], %125 {strides = array<i32>} : memref<8x32xf32, #tpu.memory_space<vmem>>, vector<8x8xf32>,
    %c0_66 = arith.constant 0 : index
    %c3_67 = arith.constant 3 : index
    %127 = vector.load %arg8[%c0_66, %c3_67] : memref<8x8xf32, #tpu.memory_space<vmem>>, vector<8x1xf32>
    tpu.vector_store %arg8[%c0_66, %c3_67], %109 {strides = array<i32>} : memref<8x8xf32, #tpu.memory_space<vmem>>, vector<8x1xf32>,
    %c0_i32_68 = arith.constant 0 : i32
    %128 = arith.cmpi eq, %arg2, %c0_i32_68 : i32
    %129 = arith.extui %128 : i1 to i32
    %c0_i32_69 = arith.constant 0 : i32
    %130 = arith.cmpi ne, %129, %c0_i32_69 : i32
    scf.if %130 {
      %c0_70 = arith.constant 0 : index
      %c4_71 = arith.constant 4 : index
      %131 = vector.load %arg8[%c0_70, %c4_71] : memref<8x8xf32, #tpu.memory_space<vmem>>, vector<8x1xf32>
      %c0_72 = arith.constant 0 : index
      %c0_73 = arith.constant 0 : index
      %132 = vector.load %arg9[%c0_72, %c0_73] : memref<8x32xf32, #tpu.memory_space<vmem>>, vector<8x8xf32>
      %133 = vector.broadcast %131 : vector<8x1xf32> to vector<8x8xf32>
      %134 = arith.divf %132, %133 : vector<8x8xf32>
      %c0_74 = arith.constant 0 : index
      %c0_75 = arith.constant 0 : index
      %135 = vector.load %arg9[%c0_74, %c0_75] : memref<8x32xf32, #tpu.memory_space<vmem>>, vector<8x8xf32>
      tpu.vector_store %arg9[%c0_74, %c0_75], %134 {strides = array<i32>} : memref<8x32xf32, #tpu.memory_space<vmem>>, vector<8x8xf32>,
      %c0_76 = arith.constant 0 : index
      %c5_77 = arith.constant 5 : index
      %136 = vector.load %arg8[%c0_76, %c5_77] : memref<8x8xf32, #tpu.memory_space<vmem>>, vector<8x1xf32>
      %c0_78 = arith.constant 0 : index
      %c8_79 = arith.constant 8 : index
      %137 = vector.load %arg9[%c0_78, %c8_79] : memref<8x32xf32, #tpu.memory_space<vmem>>, vector<8x8xf32>
      %138 = vector.broadcast %136 : vector<8x1xf32> to vector<8x8xf32>
      %139 = arith.divf %137, %138 : vector<8x8xf32>
      %c0_80 = arith.constant 0 : index
      %c8_81 = arith.constant 8 : index
      %140 = vector.load %arg9[%c0_80, %c8_81] : memref<8x32xf32, #tpu.memory_space<vmem>>, vector<8x8xf32>
      tpu.vector_store %arg9[%c0_80, %c8_81], %139 {strides = array<i32>} : memref<8x32xf32, #tpu.memory_space<vmem>>, vector<8x8xf32>,
      %c0_82 = arith.constant 0 : index
      %c6_83 = arith.constant 6 : index
      %141 = vector.load %arg8[%c0_82, %c6_83] : memref<8x8xf32, #tpu.memory_space<vmem>>, vector<8x1xf32>
      %c0_84 = arith.constant 0 : index
      %c16_85 = arith.constant 16 : index
      %142 = vector.load %arg9[%c0_84, %c16_85] : memref<8x32xf32, #tpu.memory_space<vmem>>, vector<8x8xf32>
      %143 = vector.broadcast %141 : vector<8x1xf32> to vector<8x8xf32>
      %144 = arith.divf %142, %143 : vector<8x8xf32>
      %c0_86 = arith.constant 0 : index
      %c16_87 = arith.constant 16 : index
      %145 = vector.load %arg9[%c0_86, %c16_87] : memref<8x32xf32, #tpu.memory_space<vmem>>, vector<8x8xf32>
      tpu.vector_store %arg9[%c0_86, %c16_87], %144 {strides = array<i32>} : memref<8x32xf32, #tpu.memory_space<vmem>>, vector<8x8xf32>,
      %c0_88 = arith.constant 0 : index
      %c7_89 = arith.constant 7 : index
      %146 = vector.load %arg8[%c0_88, %c7_89] : memref<8x8xf32, #tpu.memory_space<vmem>>, vector<8x1xf32>
      %c0_90 = arith.constant 0 : index
      %c24_91 = arith.constant 24 : index
      %147 = vector.load %arg9[%c0_90, %c24_91] : memref<8x32xf32, #tpu.memory_space<vmem>>, vector<8x8xf32>
      %148 = vector.broadcast %146 : vector<8x1xf32> to vector<8x8xf32>
      %149 = arith.divf %147, %148 : vector<8x8xf32>
      %c0_92 = arith.constant 0 : index
      %c24_93 = arith.constant 24 : index
      %150 = vector.load %arg9[%c0_92, %c24_93] : memref<8x32xf32, #tpu.memory_space<vmem>>, vector<8x8xf32>
      tpu.vector_store %arg9[%c0_92, %c24_93], %149 {strides = array<i32>} : memref<8x32xf32, #tpu.memory_space<vmem>>, vector<8x8xf32>,
      %c0_94 = arith.constant 0 : index
      %c0_95 = arith.constant 0 : index
      %151 = vector.load %arg9[%c0_94, %c0_95] : memref<8x32xf32, #tpu.memory_space<vmem>>, vector<8x32xf32>
      %152 = arith.truncf %151 : vector<8x32xf32> to vector<8x32xbf16>
      %c0_96 = arith.constant 0 : index
      %c0_97 = arith.constant 0 : index
      %c0_98 = arith.constant 0 : index
      %153 = vector.load %arg7[%c0_96, %c0_97, %c0_98] : memref<1x8x32xbf16, #tpu.memory_space<vmem>>, vector<1x8x32xbf16>
      %154 = vector.shape_cast %153 : vector<1x8x32xbf16> to vector<8x32xbf16>
      %155 = vector.shape_cast %152 : vector<8x32xbf16> to vector<1x8x32xbf16>
      tpu.vector_store %arg7[%c0_96, %c0_97, %c0_98], %155 {strides = array<i32>} : memref<1x8x32xbf16, #tpu.memory_space<vmem>>, vector<1x8x32xbf16>,
    } else {
    }
    return
  }
  func.func @transform_0(%arg0: i32, %arg1: i32, %arg2: i32) -> (i32, i32, i32) {
    %c0_i32 = arith.constant 0 : i32
    %c0_i32_0 = arith.constant 0 : i32
    return %arg0, %arg1, %c0_i32 : i32, i32, i32
  }
  func.func @transform_1(%arg0: i32, %arg1: i32, %arg2: i32) -> (i32, i32, i32) {
    %c0_i32 = arith.constant 0 : i32
    %c0_i32_0 = arith.constant 0 : i32
    return %arg0, %arg2, %c0_i32 : i32, i32, i32
  }
  func.func @transform_2(%arg0: i32, %arg1: i32, %arg2: i32) -> (i32, i32, i32) {
    %c0_i32 = arith.constant 0 : i32
    %c0_i32_0 = arith.constant 0 : i32
    return %arg0, %arg2, %c0_i32 : i32, i32, i32
  }
  func.func @transform_3(%arg0: i32, %arg1: i32, %arg2: i32) -> (i32, i32, i32) {
    %c0_i32 = arith.constant 0 : i32
    return %arg0, %arg1, %arg2 : i32, i32, i32
  }
  func.func @transform_4(%arg0: i32, %arg1: i32, %arg2: i32) -> (i32, i32, i32) {
    %c0_i32 = arith.constant 0 : i32
    %c0_i32_0 = arith.constant 0 : i32
    return %arg0, %arg1, %c0_i32 : i32, i32, i32
  }
}

</mosaic_0001>

<llo_original>
// kernel: multi_head_attention.5
$region0: #{multi_head_attention.5}
  #allocation0 [shape = 'u32[]', space=smem, size = 0x4, offset = 0x4, fixed_abs, tag = 'smem constant byte address 0x4 - core index']
  #allocation1 [shape = 'u32[72,128]{1,0:T(1,128)}', space=vmem, size = 0x9000, scoped, tag = 'internal scratch']
  %s0 = inlined_call_operand.vmem [shape: f32[16,32], index: 0, kind: input, shape index: {}]
  %s1 = inlined_call_operand.vmem [shape: bf16[32,32], index: 1, kind: input, shape index: {}]
  %s2 = inlined_call_operand.vmem [shape: f32[1,32], index: 2, kind: input, shape index: {}]
  %s3 = inlined_call_operand.vmem [shape: bf16[16,32], index: 3, kind: output, shape index: {}]
  %s4 = sld [smem:[#allocation0]]
  $region22: #{multi_head_attention.5} parent=0
    _
  %s6 = ssub.s32 1, %s4
  %s7 = scalar_select 0, %s6, %s4
  // Predicated region
  $region2: #{multi_head_attention.5} parent=0 // pred_check
    _
  $region3: #{multi_head_attention.5} parent=0 // pred_check_branch
    %9 = sbr.rel (0) target = $region5
  $region4: #{multi_head_attention.5} parent=0 // pred_region
    _
  $region5: #{multi_head_attention.5} parent=0 // pred_fallthru
    _
  // Predicated region
  $region6: #{multi_head_attention.5} parent=0 // pred_check
    _
  $region7: #{multi_head_attention.5} parent=0 // pred_check_branch
    %11 = sbr.rel (0) target = $region9
  $region8: #{multi_head_attention.5} parent=0 // pred_region
    _
  $region9: #{multi_head_attention.5} parent=0 // pred_fallthru
    _
  // Predicated region
  $region10: #{multi_head_attention.5} parent=0 // pred_check
    _
  $region11: #{multi_head_attention.5} parent=0 // pred_check_branch
    %13 = sbr.rel (0) target = $region13
  $region12: #{multi_head_attention.5} parent=0 // pred_region
    _
  $region13: #{multi_head_attention.5} parent=0 // pred_fallthru
    _
  %v15 = vld [vmem:[%s0] sm:$0xff]
  %v16 = vld [vmem:[%s0 + $0x8] sm:$0xff]
  %v17 = vpack.c.bf16 %v16, %v15
  %v18 = vld [vmem:[%s1] sm:$0xf]
  %v19 = vld [vmem:[%s1 + $0x4] sm:$0xf]
  %v20 = vld [vmem:[%s1 + $0x8] sm:$0xf]
  %v21 = vld [vmem:[%s1 + $0xc] sm:$0xf]
  %v22 = vld [vmem:[%s2] sm:$0x1]
  %v24 = vperm.slane %v22, 0
  %v30 = vunpack.c.l.b16 %v18
  %v31 = vunpack.c.l.b16 %v19
  %v32 = vunpack.c.l.b16 %v20
  %v33 = vunpack.c.l.b16 %v21
  %v34 = vpack.c.b16 %v31, %v30
  %v35 = vpack.c.b16 %v33, %v32
  %vm38 = vcmask 261120
  %v40 = vsel %vm38, %v17, 0
  %42 = vmatpush.bf16.msra.mxu0 0
  %43 = vmatpush.bf16.msra.mxu0 0
  %44 = vmatpush.bf16.msra.mxu0 0
  %45 = vmatpush.bf16.msra.mxu0 0
  %46 = vmatpush.bf16.msra.mxu0 0
  %47 = vmatpush.bf16.msra.mxu0 0
  %48 = vmatpush.bf16.msra.mxu0 %v35
  %49 = vmatpush.bf16.msra.mxu0 %v34
  %50 = vmatmul.bf16.gmra.mxu0 %v40
  %v51 = vpop.f32.mrf.mxu0
  %v52 = vadd.f32 %v24, %v51
  %v53 = vpop.f32.mrf.mxu0
  %v54 = vadd.f32 %v24, %v53
  %55 = vdwg.mxu0
  %v56 = vpack.c.bf16 %v52, %v52
  %v57 = vpack.c.bf16 %v54, %v54
  %vm58 = vcmask 257024
  %59 = vst.msk [vmem:[%s3] sm:$0xf] %vm58, %v56
  %60 = vst.msk [vmem:[%s3 + $0x4] sm:$0xf] %vm58, %v57
  // Predicated region
  $region14: #{multi_head_attention.5} parent=0 // pred_check
    _
  $region15: #{multi_head_attention.5} parent=0 // pred_check_branch
    %62 = sbr.rel (0) target = $region17
  $region16: #{multi_head_attention.5} parent=0 // pred_region
    _
  $region17: #{multi_head_attention.5} parent=0 // pred_fallthru
    _
  // Predicated region
  $region18: #{multi_head_attention.5} parent=0 // pred_check
    _
  $region19: #{multi_head_attention.5} parent=0 // pred_check_branch
    %64 = sbr.rel (0) target = $region21
  $region20: #{multi_head_attention.5} parent=0 // pred_region
    _
  $region21: #{multi_head_attention.5} parent=0 // pred_fallthru
    _

// kernel: multi_head_attention.9
$region0: #{multi_head_attention.9}
  #allocation0 [shape = 'u32[]', space=smem, size = 0x4, offset = 0x4, fixed_abs, tag = 'smem constant byte address 0x4 - core index']
  #allocation1 [shape = 'u32[72,128]{1,0:T(1,128)}', space=vmem, size = 0x9000, scoped, tag = 'internal scratch']
  %s0 = inlined_call_operand.vmem [shape: bf16[16,32], index: 0, kind: input, shape index: {}]
  %s1 = inlined_call_operand.vmem [shape: bf16[32,32], index: 1, kind: input, shape index: {}]
  %s2 = inlined_call_operand.vmem [shape: f32[1,32], index: 2, kind: input, shape index: {}]
  %s3 = inlined_call_operand.hbm [shape: f32[16,32], index: 3, kind: output, shape index: {}]
  %s4 = sld [smem:[#allocation0]]
  $region22: #{multi_head_attention.9} parent=0
    _
  %s6 = ssub.s32 1, %s4
  %s7 = scalar_select 0, %s6, %s4
  $region1: #{multi_head_attention.9} parent=0
    #allocation2 [shape = 'u8[8192]{0}', space=vmem, size = 0x2000, scoped, tag = 'output window, operand 0, single buffered']
    #allocation3 [shape = 's32[1]{0}', space=sflag, size = 0x4, scoped, tag = 'scoped memory for multi_head_attention.9']
    %8 = vsyncpa [#allocation3], 0
    // Predicated region
    $region2: #{multi_head_attention.9} parent=1 // pred_check
      _
    $region3: #{multi_head_attention.9} parent=1 // pred_check_branch
      %10 = sbr.rel (0) target = $region5
    $region4: #{multi_head_attention.9} parent=1 // pred_region
      _
    $region5: #{multi_head_attention.9} parent=1 // pred_fallthru
      _
    // Predicated region
    $region6: #{multi_head_attention.9} parent=1 // pred_check
      _
    $region7: #{multi_head_attention.9} parent=1 // pred_check_branch
      %12 = sbr.rel (0) target = $region9
    $region8: #{multi_head_attention.9} parent=1 // pred_region
      _
    $region9: #{multi_head_attention.9} parent=1 // pred_fallthru
      _
    // Predicated region
    $region10: #{multi_head_attention.9} parent=1 // pred_check
      _
    $region11: #{multi_head_attention.9} parent=1 // pred_check_branch
      %14 = sbr.rel (0) target = $region13
    $region12: #{multi_head_attention.9} parent=1 // pred_region
      _
    $region13: #{multi_head_attention.9} parent=1 // pred_fallthru
      _
    %v16 = vld [vmem:[%s0] sm:$0xf]
    %v17 = vld [vmem:[%s0 + $0x4] sm:$0xf]
    %v18 = vld [vmem:[%s1] sm:$0xf]
    %v19 = vld [vmem:[%s1 + $0x4] sm:$0xf]
    %v20 = vld [vmem:[%s1 + $0x8] sm:$0xf]
    %v21 = vld [vmem:[%s1 + $0xc] sm:$0xf]
    %v22 = vld [vmem:[%s2] sm:$0x1]
    %v24 = vperm.slane %v22, 0
    %v28 = vunpack.c.l.b16 %v16
    %v29 = vunpack.c.l.b16 %v17
    %v30 = vpack.c.b16 %v29, %v28
    %v35 = vunpack.c.l.b16 %v18
    %v36 = vunpack.c.l.b16 %v19
    %v37 = vunpack.c.l.b16 %v20
    %v38 = vunpack.c.l.b16 %v21
    %v39 = vpack.c.b16 %v36, %v35
    %v40 = vpack.c.b16 %v38, %v37
    %vm43 = vcmask 261120
    %v45 = vsel %vm43, %v30, 0
    %47 = vmatpush.bf16.msra.mxu0 0
    %48 = vmatpush.bf16.msra.mxu0 0
    %49 = vmatpush.bf16.msra.mxu0 0
    %50 = vmatpush.bf16.msra.mxu0 0
    %51 = vmatpush.bf16.msra.mxu0 0
    %52 = vmatpush.bf16.msra.mxu0 0
    %53 = vmatpush.bf16.msra.mxu0 %v40
    %54 = vmatpush.bf16.msra.mxu0 %v39
    %55 = vmatmul.bf16.gmra.mxu0 %v45
    %v56 = vpop.f32.mrf.mxu0
    %v57 = vadd.f32 %v24, %v56
    %v58 = vpop.f32.mrf.mxu0
    %v59 = vadd.f32 %v24, %v58
    %60 = vdwg.mxu0
    %61 = vst.msk [vmem:[#allocation2] sm:$0xff] %vm43, %v57
    %62 = vst.msk [vmem:[#allocation2 + $0x8] sm:$0xff] %vm43, %v59
    // Predicated region
    $region14: #{multi_head_attention.9} parent=1 // pred_check
      _
    $region15: #{multi_head_attention.9} parent=1 // pred_check_branch
      %64 = sbr.rel (0) target = $region17
    $region16: #{multi_head_attention.9} parent=1 // pred_region
      %66 = vsyncadd [#allocation3], 0
      %s67 = sshll.u32 [#allocation2], 4
      %s68 = int_to_ptr.vmem [resolvable:$true] %s67
      %s69 = sshll.u32 %s3, 4
      %s70 = int_to_ptr.hbm [resolvable:$true] %s69
      %75 = dma.vmem_to_hbm [thread:$0]  %s68, 256, %s70, [#allocation3], 128, 128, 8
    $region17: #{multi_head_attention.9} parent=1 // pred_fallthru
      _
    // Predicated region
    $region18: #{multi_head_attention.9} parent=1 // pred_check
      _
    $region19: #{multi_head_attention.9} parent=1 // pred_check_branch
      %77 = sbr.rel (0) target = $region21
    $region20: #{multi_head_attention.9} parent=1 // pred_region
      %79 = dma.done [#allocation3], 256
    $region21: #{multi_head_attention.9} parent=1 // pred_fallthru
      _
    %80 = vsyncpa [#allocation3], 1

// kernel: multi_head_attention.8
$region0: #{multi_head_attention.8}
  #allocation0 [shape = 'u32[]', space=smem, size = 0x4, offset = 0x4, fixed_abs, tag = 'smem constant byte address 0x4 - core index']
  #allocation1 [shape = 'u32[72,128]{1,0:T(1,128)}', space=vmem, size = 0x9000, scoped, tag = 'internal scratch']
  #allocation2 [shape = 'f32[8,8]{1,0:T(8,128)}', space=vmem, size = 0x1000, scoped, tag = 'scratch operand']
  #allocation3 [shape = 'f32[8,32]{1,0:T(8,128)}', space=vmem, size = 0x1000, scoped, tag = 'scratch operand']
  %s0 = inlined_call_operand.vmem [shape: bf16[2,8,32], index: 0, kind: input, shape index: {}]
  %s1 = inlined_call_operand.vmem [shape: bf16[2,8,32], index: 1, kind: input, shape index: {}]
  %s2 = inlined_call_operand.vmem [shape: bf16[2,8,32], index: 2, kind: input, shape index: {}]
  %s3 = inlined_call_operand.vmem [shape: s32[2,8,8], index: 3, kind: input, shape index: {}]
  %s4 = inlined_call_operand.vmem [shape: bf16[2,8,32], index: 4, kind: output, shape index: {}]
  %s5 = sld [smem:[#allocation0]]
  $region57: #{multi_head_attention.8} parent=0
    _
  %s7 = ssub.s32 1, %s5
  %s8 = scalar_select 0, %s7, %s5
  loop: start=0, step=1, limit=4
  $region2: #{multi_head_attention.8} parent=0 // loop_pre_header
    _
  $region3: #{multi_head_attention.8} parent=0 // loop_header
    %s10 = sphi 0, %s14
    %p11 = scmp.ge.s32.totalorder %s10, 4
    %s17 = sphi 0, %s36
    %s18 = sphi 0, %s32
    %s19 = sphi 0, %s28
    %s20 = sphi 0, %s17
    %s21 = sphi 0, %s18
    %s22 = sphi 0, %s19
    %s23 = sphi 0, %s20
    %s24 = sphi 0, %s21
    %s25 = sphi 0, %s22
    %s41 = sphi 0, %s43
    %s44 = sphi 0, %s41
    %s45 = sphi 0, %s44
    %s61 = sphi 0, %s45
    %s69 = sphi 0, %s71
    %s72 = sphi 0, %s69
    %s73 = sphi 0, %s72
    %s89 = sphi 0, %s73
    %s97 = sphi 0, %s99
    %s100 = sphi 0, %s97
    %s101 = sphi 0, %s100
    %s117 = sphi 0, %s101
    %s127 = sphi 0, %s129
    %s130 = sphi 0, %s127
    %s131 = sphi 0, %s130
    %s147 = sphi 0, %s131
    %s155 = sphi 0, %s157
    %s158 = sphi 0, %s155
    %s159 = sphi 0, %s158
    %s175 = sphi 0, %s159
  $region4: #{multi_head_attention.8} parent=0 // loop_header_branch
    %13 = sbr.rel (%p11) target = $region8
  $region5: #{multi_head_attention.8} parent=0 // loop_body
    %s15 = ssub.s32 %s10, 1
    %s16 = ssub.s32 %s10, 2
    %s26 = sadd.s32 1, %s19
    %p27 = scmp.ge.s32.totalorder %s26, 1
    %s28 = scalar_select %p27, 0, %s26
    %s29 = sadd.s32 1, %s18
    %s30 = scalar_select %p27, %s29, %s18
    %p31 = scmp.ge.s32.totalorder %s30, 1
    %s32 = scalar_select %p31, 0, %s30
    %s33 = sadd.s32 1, %s17
    %s34 = scalar_select %p31, %s33, %s17
    %p35 = scmp.ge.s32.totalorder %s34, 2
    %s36 = scalar_select %p35, 0, %s34
    %s37 = ssub.s32 %s17, %s36
    %s38 = ssub.s32 %s18, %s32
    %s39 = sor.u32 %s37, %s38
    %p40 = scmp.eq.s32.totalorder %s39, 0
    %s42 = sadd.s32 %s41, 1
    %s43 = scalar_select %p40, %s41, %s42
    %p46 = pneg %p40
    %p47 = scmp.eq.s32.totalorder %s10, 1
    %p48 = por %p46, %p47
    %p49 = scmp.ne.s32.totalorder %s41, %s44
    %p50 = scmp.eq.s32.totalorder %s10, 0
    %p51 = por %p49, %p50
    %p52 = scmp.ne.s32.totalorder %s41, %s44
    %p53 = scmp.eq.s32.totalorder %s15, 1
    %p54 = por %p52, %p53
    %p55 = scmp.ne.s32.totalorder %s44, %s45
    %p56 = scmp.eq.s32.totalorder %s15, 0
    %p57 = por %p55, %p56
    %p58 = scmp.ne.s32.totalorder %s44, %s45
    %p59 = scmp.eq.s32.totalorder %s16, 1
    %p60 = por %p58, %p59
    %p62 = scmp.ne.s32.totalorder %s45, %s61
    %p63 = scmp.eq.s32.totalorder %s16, 0
    %p64 = por %p62, %p63
    %s65 = ssub.s32 %s17, %s36
    %s66 = ssub.s32 %s19, %s28
    %s67 = sor.u32 %s65, %s66
    %p68 = scmp.eq.s32.totalorder %s67, 0
    %s70 = sadd.s32 %s69, 1
    %s71 = scalar_select %p68, %s69, %s70
    %p74 = pneg %p68
    %p75 = scmp.eq.s32.totalorder %s10, 1
    %p76 = por %p74, %p75
    %p77 = scmp.ne.s32.totalorder %s69, %s72
    %p78 = scmp.eq.s32.totalorder %s10, 0
    %p79 = por %p77, %p78
    %p80 = scmp.ne.s32.totalorder %s69, %s72
    %p81 = scmp.eq.s32.totalorder %s15, 1
    %p82 = por %p80, %p81
    %p83 = scmp.ne.s32.totalorder %s72, %s73
    %p84 = scmp.eq.s32.totalorder %s15, 0
    %p85 = por %p83, %p84
    %p86 = scmp.ne.s32.totalorder %s72, %s73
    %p87 = scmp.eq.s32.totalorder %s16, 1
    %p88 = por %p86, %p87
    %p90 = scmp.ne.s32.totalorder %s73, %s89
    %p91 = scmp.eq.s32.totalorder %s16, 0
    %p92 = por %p90, %p91
    %s93 = ssub.s32 %s17, %s36
    %s94 = ssub.s32 %s19, %s28
    %s95 = sor.u32 %s93, %s94
    %p96 = scmp.eq.s32.totalorder %s95, 0
    %s98 = sadd.s32 %s97, 1
    %s99 = scalar_select %p96, %s97, %s98
    %p102 = pneg %p96
    %p103 = scmp.eq.s32.totalorder %s10, 1
    %p104 = por %p102, %p103
    %p105 = scmp.ne.s32.totalorder %s97, %s100
    %p106 = scmp.eq.s32.totalorder %s10, 0
    %p107 = por %p105, %p106
    %p108 = scmp.ne.s32.totalorder %s97, %s100
    %p109 = scmp.eq.s32.totalorder %s15, 1
    %p110 = por %p108, %p109
    %p111 = scmp.ne.s32.totalorder %s100, %s101
    %p112 = scmp.eq.s32.totalorder %s15, 0
    %p113 = por %p111, %p112
    %p114 = scmp.ne.s32.totalorder %s100, %s101
    %p115 = scmp.eq.s32.totalorder %s16, 1
    %p116 = por %p114, %p115
    %p118 = scmp.ne.s32.totalorder %s101, %s117
    %p119 = scmp.eq.s32.totalorder %s16, 0
    %p120 = por %p118, %p119
    %s121 = ssub.s32 %s17, %s36
    %s122 = ssub.s32 %s18, %s32
    %s123 = sor.u32 %s121, %s122
    %s124 = ssub.s32 %s19, %s28
    %s125 = sor.u32 %s123, %s124
    %p126 = scmp.eq.s32.totalorder %s125, 0
    %s128 = sadd.s32 %s127, 1
    %s129 = scalar_select %p126, %s127, %s128
    %p132 = pneg %p126
    %p133 = scmp.eq.s32.totalorder %s10, 1
    %p134 = por %p132, %p133
    %p135 = scmp.ne.s32.totalorder %s127, %s130
    %p136 = scmp.eq.s32.totalorder %s10, 0
    %p137 = por %p135, %p136
    %p138 = scmp.ne.s32.totalorder %s127, %s130
    %p139 = scmp.eq.s32.totalorder %s15, 1
    %p140 = por %p138, %p139
    %p141 = scmp.ne.s32.totalorder %s130, %s131
    %p142 = scmp.eq.s32.totalorder %s15, 0
    %p143 = por %p141, %p142
    %p144 = scmp.ne.s32.totalorder %s130, %s131
    %p145 = scmp.eq.s32.totalorder %s16, 1
    %p146 = por %p144, %p145
    %p148 = scmp.ne.s32.totalorder %s131, %s147
    %p149 = scmp.eq.s32.totalorder %s16, 0
    %p150 = por %p148, %p149
    %s151 = ssub.s32 %s17, %s36
    %s152 = ssub.s32 %s18, %s32
    %s153 = sor.u32 %s151, %s152
    %p154 = scmp.eq.s32.totalorder %s153, 0
    %s156 = sadd.s32 %s155, 1
    %s157 = scalar_select %p154, %s155, %s156
    %p160 = pneg %p154
    %p161 = scmp.eq.s32.totalorder %s10, 1
    %p162 = por %p160, %p161
    %p163 = scmp.ne.s32.totalorder %s155, %s158
    %p164 = scmp.eq.s32.totalorder %s10, 0
    %p165 = por %p163, %p164
    %p166 = scmp.ne.s32.totalorder %s155, %s158
    %p167 = scmp.eq.s32.totalorder %s15, 1
    %p168 = por %p166, %p167
    %p169 = scmp.ne.s32.totalorder %s158, %s159
    %p170 = scmp.eq.s32.totalorder %s15, 0
    %p171 = por %p169, %p170
    %p172 = scmp.ne.s32.totalorder %s158, %s159
    %p173 = scmp.eq.s32.totalorder %s16, 1
    %p174 = por %p172, %p173
    %p176 = scmp.ne.s32.totalorder %s159, %s175
    %p177 = scmp.eq.s32.totalorder %s16, 0
    %p178 = por %p176, %p177
    %p179 = scmp.le.s32.totalorder 1, %s10
    %p180 = scmp.lt.s32.totalorder %s10, 3
    %p181 = pnand %p179, %p180
    %p182 = pneg %p181
    // Predicated region
    $region9: #{multi_head_attention.8} parent=5 // pred_check
      _
    $region10: #{multi_head_attention.8} parent=5 // pred_check_branch
      %184 = sbr.rel (%p181) target = $region12
    $region11: #{multi_head_attention.8} parent=5 // pred_region
      %s185 = ssub.s32 %s10, 1
    $region12: #{multi_head_attention.8} parent=5 // pred_fallthru
      _
    %p186 = scmp.lt.s32.totalorder %s10, 2
    // Predicated region
    $region13: #{multi_head_attention.8} parent=5 // pred_check
      %p187 = pneg %p186
    $region14: #{multi_head_attention.8} parent=5 // pred_check_branch
      %189 = sbr.rel (%p187) target = $region16
    $region15: #{multi_head_attention.8} parent=5 // pred_region
      // Predicated region
      $region17: #{multi_head_attention.8} parent=15 // pred_check
        %p190 = pneg %p51
      $region18: #{multi_head_attention.8} parent=15 // pred_check_branch
        %192 = sbr.rel (%p190) target = $region20
      $region19: #{multi_head_attention.8} parent=15 // pred_region
        %p193 = scmp.lt.s32.totalorder %s17, 1
        %s194 = scalar_select %p193, %s17, 1
        %p195 = scmp.lt.s32.totalorder %s18, 0
        %s196 = scalar_select %p195, %s18, 0
        %s197 = sadd.s32 %s196, %s194
        %s198 = smul.addr %s197, 4
        %s199 = scalar_lea.vmem %s0, %s198
      $region20: #{multi_head_attention.8} parent=15 // pred_fallthru
        _
      // Predicated region
      $region21: #{multi_head_attention.8} parent=15 // pred_check
        %p200 = pneg %p79
      $region22: #{multi_head_attention.8} parent=15 // pred_check_branch
        %202 = sbr.rel (%p200) target = $region24
      $region23: #{multi_head_attention.8} parent=15 // pred_region
        %p203 = scmp.lt.s32.totalorder %s17, 1
        %s204 = scalar_select %p203, %s17, 1
        %p205 = scmp.lt.s32.totalorder %s19, 0
        %s206 = scalar_select %p205, %s19, 0
        %s207 = sadd.s32 %s206, %s204
        %s208 = smul.addr %s207, 4
        %s209 = scalar_lea.vmem %s1, %s208
      $region24: #{multi_head_attention.8} parent=15 // pred_fallthru
        _
      // Predicated region
      $region25: #{multi_head_attention.8} parent=15 // pred_check
        %p210 = pneg %p107
      $region26: #{multi_head_attention.8} parent=15 // pred_check_branch
        %212 = sbr.rel (%p210) target = $region28
      $region27: #{multi_head_attention.8} parent=15 // pred_region
        %p213 = scmp.lt.s32.totalorder %s17, 1
        %s214 = scalar_select %p213, %s17, 1
        %p215 = scmp.lt.s32.totalorder %s19, 0
        %s216 = scalar_select %p215, %s19, 0
        %s217 = sadd.s32 %s216, %s214
        %s218 = smul.addr %s217, 4
        %s219 = scalar_lea.vmem %s2, %s218
      $region28: #{multi_head_attention.8} parent=15 // pred_fallthru
        _
      // Predicated region
      $region29: #{multi_head_attention.8} parent=15 // pred_check
        %p220 = pneg %p137
      $region30: #{multi_head_attention.8} parent=15 // pred_check_branch
        %222 = sbr.rel (%p220) target = $region32
      $region31: #{multi_head_attention.8} parent=15 // pred_region
        %p223 = scmp.lt.s32.totalorder %s17, 1
        %s224 = scalar_select %p223, %s17, 1
        %p225 = scmp.lt.s32.totalorder %s18, 0
        %s226 = scalar_select %p225, %s18, 0
        %p227 = scmp.lt.s32.totalorder %s19, 0
        %s228 = scalar_select %p227, %s19, 0
        %s229 = sadd.s32 %s228, %s226
        %s230 = sadd.s32 %s229, %s224
        %s231 = smul.addr %s230, 8
        %s232 = scalar_lea.vmem %s3, %s231
      $region32: #{multi_head_attention.8} parent=15 // pred_fallthru
        _
    $region16: #{multi_head_attention.8} parent=5 // pred_fallthru
      _
    %p233 = scmp.le.s32.totalorder 1, %s10
    %p234 = scmp.lt.s32.totalorder %s10, 3
    %p235 = pnand %p233, %p234
    %p236 = pneg %p235
    // Predicated region
    $region33: #{multi_head_attention.8} parent=5 // pred_check
      _
    $region34: #{multi_head_attention.8} parent=5 // pred_check_branch
      %238 = sbr.rel (%p235) target = $region36
    $region35: #{multi_head_attention.8} parent=5 // pred_region
      %s239 = ssub.s32 %s10, 1
      %p240 = scmp.lt.s32.totalorder %s20, 1
      %s241 = scalar_select %p240, %s20, 1
      %p242 = scmp.lt.s32.totalorder %s21, 0
      %s243 = scalar_select %p242, %s21, 0
      %s244 = sadd.s32 %s243, %s241
      %s245 = smul.addr %s244, 4
      %s246 = scalar_lea.vmem %s0, %s245
      %p247 = pneg %p57
      %p248 = pneg %p54
      %p249 = scmp.lt.s32.totalorder %s20, 1
      %s250 = scalar_select %p249, %s20, 1
      %p251 = scmp.lt.s32.totalorder %s22, 0
      %s252 = scalar_select %p251, %s22, 0
      %s253 = sadd.s32 %s252, %s250
      %s254 = smul.addr %s253, 4
      %s255 = scalar_lea.vmem %s1, %s254
      %p256 = pneg %p85
      %p257 = pneg %p82
      %p258 = scmp.lt.s32.totalorder %s20, 1
      %s259 = scalar_select %p258, %s20, 1
      %p260 = scmp.lt.s32.totalorder %s22, 0
      %s261 = scalar_select %p260, %s22, 0
      %s262 = sadd.s32 %s261, %s259
      %s263 = smul.addr %s262, 4
      %s264 = scalar_lea.vmem %s2, %s263
      %p265 = pneg %p113
      %p266 = pneg %p110
      %p267 = scmp.lt.s32.totalorder %s20, 1
      %s268 = scalar_select %p267, %s20, 1
      %p269 = scmp.lt.s32.totalorder %s21, 0
      %s270 = scalar_select %p269, %s21, 0
      %p271 = scmp.lt.s32.totalorder %s22, 0
      %s272 = scalar_select %p271, %s22, 0
      %s273 = sadd.s32 %s272, %s270
      %s274 = sadd.s32 %s273, %s268
      %s275 = smul.addr %s274, 8
      %s276 = scalar_lea.vmem %s3, %s275
      %p277 = pneg %p143
      %p278 = pneg %p140
      %p279 = pneg %p171
      %p280 = pneg %p168
      %p281 = scmp.lt.s32.totalorder %s20, 1
      %s282 = scalar_select %p281, %s20, 1
      %p283 = scmp.lt.s32.totalorder %s21, 0
      %s284 = scalar_select %p283, %s21, 0
      %s285 = sadd.s32 %s284, %s282
      %s286 = smul.addr %s285, 4
      %s287 = scalar_lea.vmem %s4, %s286
      %p288 = scmp.lt.s32.totalorder %s20, 1
      %s289 = scalar_select %p288, %s20, 1
      %p290 = scmp.lt.s32.totalorder %s21, 0
      %s291 = scalar_select %p290, %s21, 0
      %s292 = sadd.s32 %s291, %s289
      %s293 = smul.addr %s292, 4
      %s294 = scalar_lea.vmem %s0, %s293
      %p295 = scmp.lt.s32.totalorder %s20, 1
      %s296 = scalar_select %p295, %s20, 1
      %p297 = scmp.lt.s32.totalorder %s22, 0
      %s298 = scalar_select %p297, %s22, 0
      %s299 = sadd.s32 %s298, %s296
      %s300 = smul.addr %s299, 4
      %s301 = scalar_lea.vmem %s1, %s300
      %p302 = scmp.lt.s32.totalorder %s20, 1
      %s303 = scalar_select %p302, %s20, 1
      %p304 = scmp.lt.s32.totalorder %s22, 0
      %s305 = scalar_select %p304, %s22, 0
      %s306 = sadd.s32 %s305, %s303
      %s307 = smul.addr %s306, 4
      %s308 = scalar_lea.vmem %s2, %s307
      %p309 = scmp.lt.s32.totalorder %s20, 1
      %s310 = scalar_select %p309, %s20, 1
      %p311 = scmp.lt.s32.totalorder %s21, 0
      %s312 = scalar_select %p311, %s21, 0
      %p313 = scmp.lt.s32.totalorder %s22, 0
      %s314 = scalar_select %p313, %s22, 0
      %s315 = sadd.s32 %s314, %s312
      %s316 = sadd.s32 %s315, %s310
      %s317 = smul.addr %s316, 8
      %s318 = scalar_lea.vmem %s3, %s317
      %p319 = scmp.lt.s32.totalorder %s20, 1
      %s320 = scalar_select %p319, %s20, 1
      %p321 = scmp.lt.s32.totalorder %s21, 0
      %s322 = scalar_select %p321, %s21, 0
      %s323 = sadd.s32 %s322, %s320
      %s324 = smul.addr %s323, 4
      %s325 = scalar_lea.vmem %s4, %s324
      %p327 = scmp.eq.s32.totalorder %s22, 0
      // Predicated region
      $region37: #{multi_head_attention.8} parent=35 // pred_check
        %p328 = pneg %p327
      $region38: #{multi_head_attention.8} parent=35 // pred_check_branch
        %330 = sbr.rel (%p328) target = $region40
      $region39: #{multi_head_attention.8} parent=35 // pred_region
        %vm331 = vcmask 31744
        %332 = vst.msk [vmem:[#allocation2] sm:$0xff] %vm331, -inf
        %vm333 = vcmask 64544
        %334 = vst.msk [vmem:[#allocation2] sm:$0xff] %vm333, 0.0
        %vm335 = vcmask 261120
        %336 = vst.msk [vmem:[#allocation3] sm:$0xff] %vm335, 0.0
      $region40: #{multi_head_attention.8} parent=35 // pred_fallthru
        _
      %v337 = vld [vmem:[%s294] sm:$0xf]
      %v338 = vld [vmem:[%s301] sm:$0xf]
      %v339 = vld [vmem:[%s308] sm:$0xf]
      %v340 = vld [vmem:[%s318] sm:$0xff]
      %vm341 = vcmp.eq.s32.totalorder %v340, 0
      %v342 = vsel %vm341, -1e+09, 0.0
      %vm343 = vcmask 64512
      %v345 = vsel %vm343, %v337, 0
      %v348 = vsel %vm343, %v338, 0
      %350 = vmatpush.bf16.xpose.msra.mxu0 0
      %351 = vmatpush.bf16.xpose.msra.mxu0 0
      %352 = vmatpush.bf16.xpose.msra.mxu0 0
      %353 = vmatpush.bf16.xpose.msra.mxu0 0
      %354 = vmatpush.bf16.xpose.msra.mxu0 0
      %355 = vmatpush.bf16.xpose.msra.mxu0 0
      %356 = vmatpush.bf16.xpose.msra.mxu0 0
      %357 = vmatpush.bf16.xpose.msra.mxu0 %v348
      %358 = vmatmul.bf16.gmra.mxu0 %v345
      %v359 = vpop.f32.mrf.mxu0
      %v360 = vadd.f32 %v342, %v359
      %v361 = vpop.f32.mrf.mxu0
      %362 = vdwg.mxu0
      %v363 = vld [vmem:[#allocation2] sm:$0xff]
      %v364 = vsel %vm343, %v360, -inf
      %365 = vmax.xlane.f32.xlu0 %v364
      %v366 = vpop.xlane.xlu0 %365
      %v367 = vmax.f32 %v363, %v366
      %v368 = vsub.f32 %v363, %v367
      %v369 = vmul.f32 %v368, 1.442695
      %v370 = vpow.pop %v369
      %372 = vset.pattern.permute.xlu0 0
      %373 = vperm.xlu0 %372, %v367
      %v374 = vpop.permute.xlu0 %373
      %v376 = vsub.f32 %v360, %v374
      %v377 = vmul.f32 %v376, 1.442695
      %v378 = vpow.pop %v377
      %380 = vrot.lane.b32.xlu0 %v363, 124
      %v381 = vpop.permute.xlu0 %380
      %v383 = vmul.f32 %v370, %v381
      %v384 = vsel %vm343, %v378, 0.0
      %385 = vadd.xlane.f32.xlu0 %v384
      %v386 = vpop.xlane.xlu0 %385
      %v387 = vadd.f32 %v383, %v386
      %389 = vrot.lane.b32.xlu0 %v387, 4
      %v390 = vpop.permute.xlu0 %389
      %vm392 = vcmask 39968
      %393 = vst.msk [vmem:[#allocation2] sm:$0xff] %vm392, %v390
      %v394 = vld [vmem:[#allocation3] sm:$0xff]
      %396 = vset.pattern.permute.xlu0 0
      %397 = vperm.xlu0 %396, %v370
      %v398 = vpop.permute.xlu0 %397
      %v400 = vmul.f32 %v398, %v394
      %v401 = vpack.c.bf16 %v378, %v378
      %v403 = vsel %vm343, %v401, 0
      %vm405 = vcmask 1043456
      %v407 = vsel %vm405, %v339, 0
      %409 = vmatpush.bf16.msra.mxu0 0
      %410 = vmatpush.bf16.msra.mxu0 0
      %411 = vmatpush.bf16.msra.mxu0 0
      %412 = vmatpush.bf16.msra.mxu0 0
      %413 = vmatpush.bf16.msra.mxu0 0
      %414 = vmatpush.bf16.msra.mxu0 0
      %415 = vmatpush.bf16.msra.mxu0 0
      %416 = vmatpush.bf16.msra.mxu0 %v407
      %417 = vmatmul.bf16.gmra.mxu0 %v403
      %v418 = vpop.f32.mrf.mxu0
      %v419 = vadd.f32 0.0, %v418
      %v420 = vpop.f32.mrf.mxu0
      %421 = vdwg.mxu0
      %v422 = vadd.f32 %v400, %v419
      %423 = vst.msk [vmem:[#allocation3] sm:$0xff] %vm343, %v422
      %vm424 = vcmask 7168
      %425 = vst.msk [vmem:[#allocation2] sm:$0xff] %vm424, %v367
      %v427 = vunpack.c.l.b16 %v337
      %v428 = vpack.c.b16 %v427, %v427
      %429 = vrot.lane.b32.xlu0 %v428, 120
      %v430 = vpop.permute.xlu0 %429
      %v432 = vunpack.c.l.b16 %v338
      %v433 = vpack.c.b16 %v432, %v432
      %434 = vrot.lane.b32.xlu0 %v433, 120
      %v435 = vpop.permute.xlu0 %434
      %v437 = vsel %vm343, %v430, 0
      %v440 = vsel %vm343, %v435, 0
      %442 = vmatpush.bf16.xpose.msra.mxu0 0
      %443 = vmatpush.bf16.xpose.msra.mxu0 0
      %444 = vmatpush.bf16.xpose.msra.mxu0 0
      %445 = vmatpush.bf16.xpose.msra.mxu0 0
      %446 = vmatpush.bf16.xpose.msra.mxu0 0
      %447 = vmatpush.bf16.xpose.msra.mxu0 0
      %448 = vmatpush.bf16.xpose.msra.mxu0 0
      %449 = vmatpush.bf16.xpose.msra.mxu0 %v440
      %450 = vmatmul.bf16.gmra.mxu0 %v437
      %v451 = vpop.f32.mrf.mxu0
      %v452 = vadd.f32 %v342, %v451
      %v453 = vpop.f32.mrf.mxu0
      %454 = vdwg.mxu0
      %v455 = vld [vmem:[#allocation2] sm:$0xff]
      %v456 = vsel %vm343, %v452, -inf
      %457 = vmax.xlane.f32.xlu0 %v456
      %v458 = vpop.xlane.xlu0 %457
      %v459 = vmax.f32 %v455, %v458
      %v460 = vsub.f32 %v455, %v459
      %v461 = vmul.f32 %v460, 1.442695
      %v462 = vpow.pop %v461
      %464 = vset.pattern.permute.xlu0 1
      %465 = vperm.xlu0 %464, %v459
      %v466 = vpop.permute.xlu0 %465
      %v468 = vsub.f32 %v452, %v466
      %v469 = vmul.f32 %v468, 1.442695
      %v470 = vpow.pop %v469
      %472 = vrot.lane.b32.xlu0 %v455, 124
      %v473 = vpop.permute.xlu0 %472
      %v475 = vmul.f32 %v462, %v473
      %v476 = vsel %vm343, %v470, 0.0
      %477 = vadd.xlane.f32.xlu0 %v476
      %v478 = vpop.xlane.xlu0 %477
      %v479 = vadd.f32 %v475, %v478
      %481 = vrot.lane.b32.xlu0 %v479, 4
      %v482 = vpop.permute.xlu0 %481
      %vm484 = vcmask 48168
      %485 = vst.msk [vmem:[#allocation2] sm:$0xff] %vm484, %v482
      %v486 = vld [vmem:[#allocation3] sm:$0xff]
      %488 = vset.pattern.permute.xlu0 1
      %489 = vperm.xlu0 %488, %v462
      %v490 = vpop.permute.xlu0 %489
      %v492 = vmul.f32 %v490, %v486
      %v493 = vpack.c.bf16 %v470, %v470
      %v495 = vunpack.c.l.b16 %v339
      %v496 = vpack.c.b16 %v495, %v495
      %497 = vrot.lane.b32.xlu0 %v496, 120
      %v498 = vpop.permute.xlu0 %497
      %v500 = vsel %vm343, %v493, 0
      %v503 = vsel %vm405, %v498, 0
      %505 = vmatpush.bf16.msra.mxu0 0
      %506 = vmatpush.bf16.msra.mxu0 0
      %507 = vmatpush.bf16.msra.mxu0 0
      %508 = vmatpush.bf16.msra.mxu0 0
      %509 = vmatpush.bf16.msra.mxu0 0
      %510 = vmatpush.bf16.msra.mxu0 0
      %511 = vmatpush.bf16.msra.mxu0 0
      %512 = vmatpush.bf16.msra.mxu0 %v503
      %513 = vmatmul.bf16.gmra.mxu0 %v500
      %v514 = vpop.f32.mrf.mxu0
      %v515 = vadd.f32 0.0, %v514
      %v516 = vpop.f32.mrf.mxu0
      %517 = vdwg.mxu0
      %519 = vrot.lane.b32.xlu0 %v515, 8
      %v520 = vpop.permute.xlu0 %519
      %v522 = vadd.f32 %v492, %v520
      %vm523 = vcmask 130112
      %524 = vst.msk [vmem:[#allocation3] sm:$0xff] %vm523, %v522
      %vm525 = vcmask 15368
      %526 = vst.msk [vmem:[#allocation2] sm:$0xff] %vm525, %v459
      %527 = vrot.lane.b32.xlu0 %v428, 112
      %v528 = vpop.permute.xlu0 %527
      %529 = vrot.lane.b32.xlu0 %v433, 112
      %v530 = vpop.permute.xlu0 %529
      %v532 = vsel %vm343, %v528, 0
      %v535 = vsel %vm343, %v530, 0
      %537 = vmatpush.bf16.xpose.msra.mxu0 0
      %538 = vmatpush.bf16.xpose.msra.mxu0 0
      %539 = vmatpush.bf16.xpose.msra.mxu0 0
      %540 = vmatpush.bf16.xpose.msra.mxu0 0
      %541 = vmatpush.bf16.xpose.msra.mxu0 0
      %542 = vmatpush.bf16.xpose.msra.mxu0 0
      %543 = vmatpush.bf16.xpose.msra.mxu0 0
      %544 = vmatpush.bf16.xpose.msra.mxu0 %v535
      %545 = vmatmul.bf16.gmra.mxu0 %v532
      %v546 = vpop.f32.mrf.mxu0
      %v547 = vadd.f32 %v342, %v546
      %v548 = vpop.f32.mrf.mxu0
      %549 = vdwg.mxu0
      %v550 = vld [vmem:[#allocation2] sm:$0xff]
      %v551 = vsel %vm343, %v547, -inf
      %552 = vmax.xlane.f32.xlu0 %v551
      %v553 = vpop.xlane.xlu0 %552
      %v554 = vmax.f32 %v550, %v553
      %v555 = vsub.f32 %v550, %v554
      %v556 = vmul.f32 %v555, 1.442695
      %v557 = vpow.pop %v556
      %559 = vset.pattern.permute.xlu0 2
      %560 = vperm.xlu0 %559, %v554
      %v561 = vpop.permute.xlu0 %560
      %v563 = vsub.f32 %v547, %v561
      %v564 = vmul.f32 %v563, 1.442695
      %v565 = vpow.pop %v564
      %567 = vrot.lane.b32.xlu0 %v550, 124
      %v568 = vpop.permute.xlu0 %567
      %v570 = vmul.f32 %v557, %v568
      %v571 = vsel %vm343, %v565, 0.0
      %572 = vadd.xlane.f32.xlu0 %v571
      %v573 = vpop.xlane.xlu0 %572
      %v574 = vadd.f32 %v570, %v573
      %576 = vrot.lane.b32.xlu0 %v574, 4
      %v577 = vpop.permute.xlu0 %576
      %vm579 = vcmask 56368
      %580 = vst.msk [vmem:[#allocation2] sm:$0xff] %vm579, %v577
      %v581 = vld [vmem:[#allocation3] sm:$0xff]
      %583 = vset.pattern.permute.xlu0 2
      %584 = vperm.xlu0 %583, %v557
      %v585 = vpop.permute.xlu0 %584
      %v587 = vmul.f32 %v585, %v581
      %v588 = vpack.c.bf16 %v565, %v565
      %589 = vrot.lane.b32.xlu0 %v496, 112
      %v590 = vpop.permute.xlu0 %589
      %v592 = vsel %vm343, %v588, 0
      %v595 = vsel %vm405, %v590, 0
      %597 = vmatpush.bf16.msra.mxu0 0
      %598 = vmatpush.bf16.msra.mxu0 0
      %599 = vmatpush.bf16.msra.mxu0 0
      %600 = vmatpush.bf16.msra.mxu0 0
      %601 = vmatpush.bf16.msra.mxu0 0
      %602 = vmatpush.bf16.msra.mxu0 0
      %603 = vmatpush.bf16.msra.mxu0 0
      %604 = vmatpush.bf16.msra.mxu0 %v595
      %605 = vmatmul.bf16.gmra.mxu0 %v592
      %v606 = vpop.f32.mrf.mxu0
      %v607 = vadd.f32 0.0, %v606
      %v608 = vpop.f32.mrf.mxu0
      %609 = vdwg.mxu0
      %611 = vrot.lane.b32.xlu0 %v607, 16
      %v612 = vpop.permute.xlu0 %611
      %v614 = vadd.f32 %v587, %v612
      %vm615 = vcmask 195712
      %616 = vst.msk [vmem:[#allocation3] sm:$0xff] %vm615, %v614
      %vm617 = vcmask 23568
      %618 = vst.msk [vmem:[#allocation2] sm:$0xff] %vm617, %v554
      %619 = vrot.lane.b32.xlu0 %v428, 104
      %v620 = vpop.permute.xlu0 %619
      %621 = vrot.lane.b32.xlu0 %v433, 104
      %v622 = vpop.permute.xlu0 %621
      %v624 = vsel %vm343, %v620, 0
      %v627 = vsel %vm343, %v622, 0
      %629 = vmatpush.bf16.xpose.msra.mxu0 0
      %630 = vmatpush.bf16.xpose.msra.mxu0 0
      %631 = vmatpush.bf16.xpose.msra.mxu0 0
      %632 = vmatpush.bf16.xpose.msra.mxu0 0
      %633 = vmatpush.bf16.xpose.msra.mxu0 0
      %634 = vmatpush.bf16.xpose.msra.mxu0 0
      %635 = vmatpush.bf16.xpose.msra.mxu0 0
      %636 = vmatpush.bf16.xpose.msra.mxu0 %v627
      %637 = vmatmul.bf16.gmra.mxu0 %v624
      %v638 = vpop.f32.mrf.mxu0
      %v639 = vadd.f32 %v342, %v638
      %v640 = vpop.f32.mrf.mxu0
      %641 = vdwg.mxu0
      %v642 = vld [vmem:[#allocation2] sm:$0xff]
      %v643 = vsel %vm343, %v639, -inf
      %644 = vmax.xlane.f32.xlu0 %v643
      %v645 = vpop.xlane.xlu0 %644
      %v646 = vmax.f32 %v642, %v645
      %v647 = vsub.f32 %v642, %v646
      %v648 = vmul.f32 %v647, 1.442695
      %v649 = vpow.pop %v648
      %651 = vset.pattern.permute.xlu0 3
      %652 = vperm.xlu0 %651, %v646
      %v653 = vpop.permute.xlu0 %652
      %v655 = vsub.f32 %v639, %v653
      %v656 = vmul.f32 %v655, 1.442695
      %v657 = vpow.pop %v656
      %659 = vrot.lane.b32.xlu0 %v642, 124
      %v660 = vpop.permute.xlu0 %659
      %v662 = vmul.f32 %v649, %v660
      %v663 = vsel %vm343, %v657, 0.0
      %664 = vadd.xlane.f32.xlu0 %v663
      %v665 = vpop.xlane.xlu0 %664
      %v666 = vadd.f32 %v662, %v665
      %668 = vrot.lane.b32.xlu0 %v666, 4
      %v669 = vpop.permute.xlu0 %668
      %vm671 = vcmask 64568
      %672 = vst.msk [vmem:[#allocation2] sm:$0xff] %vm671, %v669
      %v673 = vld [vmem:[#allocation3] sm:$0xff]
      %675 = vset.pattern.permute.xlu0 3
      %676 = vperm.xlu0 %675, %v649
      %v677 = vpop.permute.xlu0 %676
      %v679 = vmul.f32 %v677, %v673
      %v680 = vpack.c.bf16 %v657, %v657
      %681 = vrot.lane.b32.xlu0 %v496, 104
      %v682 = vpop.permute.xlu0 %681
      %v684 = vsel %vm343, %v680, 0
      %v687 = vsel %vm405, %v682, 0
      %689 = vmatpush.bf16.msra.mxu0 0
      %690 = vmatpush.bf16.msra.mxu0 0
      %691 = vmatpush.bf16.msra.mxu0 0
      %692 = vmatpush.bf16.msra.mxu0 0
      %693 = vmatpush.bf16.msra.mxu0 0
      %694 = vmatpush.bf16.msra.mxu0 0
      %695 = vmatpush.bf16.msra.mxu0 0
      %696 = vmatpush.bf16.msra.mxu0 %v687
      %697 = vmatmul.bf16.gmra.mxu0 %v684
      %v698 = vpop.f32.mrf.mxu0
      %v699 = vadd.f32 0.0, %v698
      %v700 = vpop.f32.mrf.mxu0
      %701 = vdwg.mxu0
      %703 = vrot.lane.b32.xlu0 %v699, 24
      %v704 = vpop.permute.xlu0 %703
      %v706 = vadd.f32 %v679, %v704
      %vm707 = vcmask 261312
      %708 = vst.msk [vmem:[#allocation3] sm:$0xff] %vm707, %v706
      %vm709 = vcmask 31768
      %710 = vst.msk [vmem:[#allocation2] sm:$0xff] %vm709, %v646
      // Predicated region
      $region41: #{multi_head_attention.8} parent=35 // pred_check
        %p711 = pneg %p327
      $region42: #{multi_head_attention.8} parent=35 // pred_check_branch
        %713 = sbr.rel (%p711) target = $region44
      $region43: #{multi_head_attention.8} parent=35 // pred_region
        %v714 = vld [vmem:[#allocation2] sm:$0xff]
        %v715 = vld [vmem:[#allocation3] sm:$0xff]
        %717 = vset.pattern.permute.xlu0 4
        %718 = vperm.xlu0 %717, %v714
        %v719 = vpop.permute.xlu0 %718
        %v721 = vrcp.pop %v719
        %v722 = vmul.f32 %v719, %v721
        %v723 = vsub.f32 1.0, %v722
        %v724 = vmul.f32 %v721, %v723
        %v725 = vadd.f32 %v721, %v724
        %vm726 = vweird.f32 %v719
        %vm727 = vweird.f32 %v721
        %vm728 = vmor %vm726, %vm727
        %v729 = vsel %vm728, %v721, %v725
        %v730 = vand.u32 2147483647, %v719
        %vm731 = vcmp.eq.f32.partialorder %v730, 8.507059e+37
        %v732 = vand.u32 %v719, 2147483648
        %v733 = vor.u32 1.1754944e-38, %v732
        %v734 = vsel %vm731, %v733, %v729
        %v735 = vmul.f32 %v715, %v734
        %736 = vst.msk [vmem:[#allocation3] sm:$0xff] %vm343, %v735
        %v737 = vld [vmem:[#allocation2] sm:$0xff]
        %v738 = vld [vmem:[#allocation3] sm:$0xff]
        %740 = vset.pattern.permute.xlu0 5
        %741 = vperm.xlu0 %740, %v737
        %v742 = vpop.permute.xlu0 %741
        %v744 = vrcp.pop %v742
        %v745 = vmul.f32 %v742, %v744
        %v746 = vsub.f32 1.0, %v745
        %v747 = vmul.f32 %v744, %v746
        %v748 = vadd.f32 %v744, %v747
        %vm749 = vweird.f32 %v742
        %vm750 = vweird.f32 %v744
        %vm751 = vmor %vm749, %vm750
        %v752 = vsel %vm751, %v744, %v748
        %v753 = vand.u32 2147483647, %v742
        %vm754 = vcmp.eq.f32.partialorder %v753, 8.507059e+37
        %v755 = vand.u32 %v742, 2147483648
        %v756 = vor.u32 1.1754944e-38, %v755
        %v757 = vsel %vm754, %v756, %v752
        %v758 = vmul.f32 %v738, %v757
        %759 = vst.msk [vmem:[#allocation3] sm:$0xff] %vm523, %v758
        %v760 = vld [vmem:[#allocation2] sm:$0xff]
        %v761 = vld [vmem:[#allocation3] sm:$0xff]
        %763 = vset.pattern.permute.xlu0 6
        %764 = vperm.xlu0 %763, %v760
        %v765 = vpop.permute.xlu0 %764
        %v767 = vrcp.pop %v765
        %v768 = vmul.f32 %v765, %v767
        %v769 = vsub.f32 1.0, %v768
        %v770 = vmul.f32 %v767, %v769
        %v771 = vadd.f32 %v767, %v770
        %vm772 = vweird.f32 %v765
        %vm773 = vweird.f32 %v767
        %vm774 = vmor %vm772, %vm773
        %v775 = vsel %vm774, %v767, %v771
        %v776 = vand.u32 2147483647, %v765
        %vm777 = vcmp.eq.f32.partialorder %v776, 8.507059e+37
        %v778 = vand.u32 %v765, 2147483648
        %v779 = vor.u32 1.1754944e-38, %v778
        %v780 = vsel %vm777, %v779, %v775
        %v781 = vmul.f32 %v761, %v780
        %782 = vst.msk [vmem:[#allocation3] sm:$0xff] %vm615, %v781
        %v783 = vld [vmem:[#allocation2] sm:$0xff]
        %v784 = vld [vmem:[#allocation3] sm:$0xff]
        %786 = vset.pattern.permute.xlu0 7
        %787 = vperm.xlu0 %786, %v783
        %v788 = vpop.permute.xlu0 %787
        %v790 = vrcp.pop %v788
        %v791 = vmul.f32 %v788, %v790
        %v792 = vsub.f32 1.0, %v791
        %v793 = vmul.f32 %v790, %v792
        %v794 = vadd.f32 %v790, %v793
        %vm795 = vweird.f32 %v788
        %vm796 = vweird.f32 %v790
        %vm797 = vmor %vm795, %vm796
        %v798 = vsel %vm797, %v790, %v794
        %v799 = vand.u32 2147483647, %v788
        %vm800 = vcmp.eq.f32.partialorder %v799, 8.507059e+37
        %v801 = vand.u32 %v788, 2147483648
        %v802 = vor.u32 1.1754944e-38, %v801
        %v803 = vsel %vm800, %v802, %v798
        %v804 = vmul.f32 %v784, %v803
        %805 = vst.msk [vmem:[#allocation3] sm:$0xff] %vm707, %v804
        %v806 = vld [vmem:[#allocation3] sm:$0xff]
        %v807 = vpack.c.bf16 %v806, %v806
        %vm808 = vcmask 257024
        %809 = vst.msk [vmem:[%s325] sm:$0xf] %vm808, %v807
      $region44: #{multi_head_attention.8} parent=35 // pred_fallthru
        _
      %p810 = scmp.lt.s32.totalorder %s20, 1
      %s811 = scalar_select %p810, %s20, 1
      %p812 = scmp.lt.s32.totalorder %s21, 0
      %s813 = scalar_select %p812, %s21, 0
      %s814 = sadd.s32 %s813, %s811
      %s815 = smul.addr %s814, 4
      %s816 = scalar_lea.vmem %s4, %s815
      // Predicated region
      $region45: #{multi_head_attention.8} parent=35 // pred_check
        %p817 = pneg %p168
      $region46: #{multi_head_attention.8} parent=35 // pred_check_branch
        %819 = sbr.rel (%p817) target = $region48
      $region47: #{multi_head_attention.8} parent=35 // pred_region
        _
      $region48: #{multi_head_attention.8} parent=35 // pred_fallthru
        _
    $region36: #{multi_head_attention.8} parent=5 // pred_fallthru
      _
    %p820 = scmp.le.s32.totalorder 2, %s10
    // Predicated region
    $region49: #{multi_head_attention.8} parent=5 // pred_check
      %p821 = pneg %p820
    $region50: #{multi_head_attention.8} parent=5 // pred_check_branch
      %823 = sbr.rel (%p821) target = $region52
    $region51: #{multi_head_attention.8} parent=5 // pred_region
      %s824 = ssub.s32 %s10, 2
      // Predicated region
      $region53: #{multi_head_attention.8} parent=51 // pred_check
        %p825 = pneg %p174
      $region54: #{multi_head_attention.8} parent=51 // pred_check_branch
        %827 = sbr.rel (%p825) target = $region56
      $region55: #{multi_head_attention.8} parent=51 // pred_region
        %p828 = scmp.lt.s32.totalorder %s23, 1
        %s829 = scalar_select %p828, %s23, 1
        %p830 = scmp.lt.s32.totalorder %s24, 0
        %s831 = scalar_select %p830, %s24, 0
        %s832 = sadd.s32 %s831, %s829
        %s833 = smul.addr %s832, 4
        %s834 = scalar_lea.vmem %s4, %s833
      $region56: #{multi_head_attention.8} parent=51 // pred_fallthru
        _
    $region52: #{multi_head_attention.8} parent=5 // pred_fallthru
      _
  $region6: #{multi_head_attention.8} parent=0 // loop_footer
    %s14 = sadd.s32 1, %s10
  $region7: #{multi_head_attention.8} parent=0 // loop_footer_branch
    %9 = sbr.rel target = $region3
  $region8: #{multi_head_attention.8} parent=0 // loop_exit
    _

</llo_original>
